<compile_context>
chip_gen: v5e
topology: v5e:2x2
jax: 0.10.0
libtpu: 0.0.40
codegen_flags: <defaults>
</compile_context>

<pallas_src>
import jax
import jax.numpy as jnp
from jax.experimental import pallas as pl
from jax.experimental.pallas import tpu as pltpu


def _make_downsample_kernel(TH2, W2, C, num_th):
    ME = TH2 * W2          # output pixels per tile
    C2 = 2 * C
    K4 = 4 * C

    def widen(blk):
        """(R, 2*C) pixel-pair block -> (R, 4*C) im2col of the 4 column taps.

        Row s of blk is pixel (row, w2 = s % W2); channels [0:C] / [C:2C] are
        image columns 2*w2 / 2*w2+1.  Output channel dxx*C+ci is image column
        2*w2 - 1 + dxx (zero outside the image: conv padding = 1).
        """
        R = blk.shape[0]
        xe = blk[:, :C]                      # image column 2*w2
        xo = blk[:, C:]                      # image column 2*w2 + 1
        colv = jax.lax.broadcasted_iota(jnp.int32, (R, 1), 0) % W2
        # previous image column (2*w2 - 1): odd half of the previous pixel.
        left = jnp.where(colv > 0, pltpu.roll(xo, shift=1, axis=0), 0)
        # next-next image column (2*w2 + 2): even half of the next pixel.
        # (cyclic shift by R-1 == shift by -1; pltpu.roll requires shift >= 0,
        #  every wrapped position is masked to zero by the colv test.)
        right = jnp.where(colv < W2 - 1, pltpu.roll(xe, shift=R - 1, axis=0), 0)
        return jnp.concatenate([left, blk, right], axis=-1)

    def kernel(xe_ref, xo_ref, top_ref, bot_ref, w_ref, b_ref, o_ref,
               se_ref, so_ref):
        t = pl.program_id(1)

        # Stage the column-widened features once per row parity (VMEM scratch):
        #   se rows [k*W2,(k+1)*W2): image row 2*(r0+k),   k = 0..TH2 (k=TH2: bottom halo)
        #   so rows [k*W2,(k+1)*W2): image row 2*(r0+k)-1, k = 0..TH2 (k=0:   top halo)
        se_ref[pl.ds(0, ME), :] = widen(xe_ref[...].reshape(ME, C2))
        so_ref[pl.ds(W2, ME), :] = widen(xo_ref[...].reshape(ME, C2))
        # 1-image-row halos; zeroed at the true image boundary (conv padding).
        so_ref[pl.ds(0, W2), :] = jnp.where(t > 0, widen(top_ref[...]), 0)
        se_ref[pl.ds(ME, W2), :] = jnp.where(t < num_th - 1, widen(bot_ref[...]), 0)

        # Conv + PixelUnshuffle as 4 MXU matmuls over W2-row-shifted scratch
        # *views* (no operand copies); f32 accumulation, lane-dense output.
        acc = jnp.dot(se_ref[pl.ds(0, ME), :], w_ref[1],
                      preferred_element_type=jnp.float32)            # conv row 2*h2
        acc = acc + jnp.dot(so_ref[pl.ds(W2, ME), :], w_ref[2],
                            preferred_element_type=jnp.float32)      # conv row 2*h2 + 1
        acc = acc + jnp.dot(so_ref[pl.ds(0, ME), :], w_ref[0],
                            preferred_element_type=jnp.float32)      # conv row 2*h2 - 1
        acc = acc + jnp.dot(se_ref[pl.ds(W2, ME), :], w_ref[3],
                            preferred_element_type=jnp.float32)      # conv row 2*h2 + 2
        acc = acc + b_ref[...]
        o_ref[...] = acc.astype(o_ref.dtype)

    return kernel


def _pick_tile_rows(H2, W2, C, N4p, itemsize):
    """Largest divisor of H2 whose tile fits a ~12 MiB VMEM budget and keeps the
    output block a whole number of sublane tiles (8 f32 / 16 bf16)."""
    sublane = max(8, 32 // max(itemsize, 1))
    # tile-dependent VMEM per output row: even+odd input blocks (double-buffered),
    # output block (double-buffered), 2 xw scratch buffers.
    per_row = W2 * itemsize * (2 * 2 * (2 * C) + 2 * N4p + 2 * (4 * C))
    cap = max(1, (12 * 1024 * 1024) // max(per_row, 1))
    if H2 >= 4:
        cap = min(cap, H2 // 2)      # >= 2 row tiles: pipeline overlap + megacore axis
    best = None
    for th2 in range(1, min(cap, H2) + 1):
        if H2 % th2 == 0 and (th2 * W2) % sublane == 0:
            best = th2
    return best if best is not None else H2   # TH2 == H2 is always legal (full dims)


def downsample(x, weight, bias, *, tile_rows=None):
    """Fused Conv2d(C -> C//2, 3x3, s1, p1) + PixelUnshuffle(2), NHWC in/out.

    x: (N, H, W, C); weight: (C//2, C, 3, 3); bias: (C//2,)
    Returns (N, H//2, W//2, 2*C), matching the PyTorch Downsample forward.
    """
    N, H, W, C = x.shape
    Cout = weight.shape[0]
    assert weight.shape == (Cout, C, 3, 3) and H % 2 == 0 and W % 2 == 0
    H2, W2 = H // 2, W // 2
    K4 = 4 * C
    N4 = 4 * Cout                                   # == 2*C for this module
    N4p = ((N4 + 127) // 128) * 128                 # lane-dense padded channels

    itemsize = jnp.dtype(x.dtype).itemsize
    TH2 = tile_rows if tile_rows is not None else _pick_tile_rows(H2, W2, C, N4p, itemsize)
    assert H2 % TH2 == 0
    num_th = H2 // TH2
    ME = TH2 * W2

    # Re-pack the 3x3 taps so every conv output lands at its PixelUnshuffle slot:
    #   wbig[dyy, dxx*C + ci, co*4 + i*2 + j] = weight[co, ci, dyy - i, dxx - j]
    # (zero where dyy-i / dxx-j fall outside 0..2).  dyy/dxx in 0..3 index the 4
    # input rows / columns touched by the 2x2 output block of pixel (h2, w2).
    w_t = jnp.transpose(weight, (2, 3, 1, 0))                   # (dy, dx, ci, co)
    wbig = jnp.zeros((4, 4, C, Cout, 2, 2), weight.dtype)
    for i in (0, 1):
        for j in (0, 1):
            wbig = wbig.at[i:i + 3, j:j + 3, :, :, i, j].set(w_t)
    wbig = wbig.reshape(4, K4, N4)
    bias4 = jnp.repeat(bias, 4)
    if N4p != N4:                                   # zero-pad to lane-dense width
        wbig = jnp.pad(wbig, ((0, 0), (0, 0), (0, N4p - N4)))
        bias4 = jnp.pad(bias4, (0, N4p - N4))
    wbig = wbig.astype(x.dtype)                     # bf16 x -> bf16 MXU operands
    bias4 = bias4.reshape(1, N4p).astype(jnp.float32)

    # Free row-major reshape: x5[n, h2, i, w2, j*C + c] = x[n, 2*h2+i, 2*w2+j, c]
    x5 = x.reshape(N, H2, 2, W2, 2 * C)

    kernel = _make_downsample_kernel(TH2, W2, C, num_th)

    out_flat = pl.pallas_call(
        kernel,
        out_shape=jax.ShapeDtypeStruct((N, H2 * W2, N4p), x.dtype),
        grid=(N, num_th),
        in_specs=[
            # even image rows of the slab:  x[n, 2*(r0+lr), :, :]
            pl.BlockSpec((None, TH2, None, W2, 2 * C),
                         lambda n, t: (n, t, 0, 0, 0)),
            # odd image rows of the slab:   x[n, 2*(r0+lr)+1, :, :]
            pl.BlockSpec((None, TH2, None, W2, 2 * C),
                         lambda n, t: (n, t, 1, 0, 0)),
            # top halo (image row 2*r0-1, odd row of slab t-1); clamped, zeroed at t==0
            pl.BlockSpec((None, None, None, W2, 2 * C),
                         lambda n, t: (n, jnp.maximum(t * TH2 - 1, 0), 1, 0, 0)),
            # bottom halo (image row 2*(r0+TH2), even row of slab t+1); clamped, zeroed at last t
            pl.BlockSpec((None, None, None, W2, 2 * C),
                         lambda n, t: (n, jnp.minimum((t + 1) * TH2, H2 - 1), 0, 0, 0)),
            pl.BlockSpec((4, K4, N4p), lambda n, t: (0, 0, 0)),
            pl.BlockSpec((1, N4p), lambda n, t: (0, 0)),
        ],
        out_specs=pl.BlockSpec((None, ME, N4p), lambda n, t: (n, t, 0)),
        scratch_shapes=[
            pltpu.VMEM(((TH2 + 1) * W2, K4), x.dtype),   # xw, even image rows
            pltpu.VMEM(((TH2 + 1) * W2, K4), x.dtype),   # xw, odd image rows
        ],
        compiler_params=pltpu.CompilerParams(
            dimension_semantics=("parallel", "parallel"),
            # 48 MiB: headroom on v7x (64 MiB physical per TC), ample on v5e/v6e.
            vmem_limit_bytes=48 * 1024 * 1024),
    )(x5, x5, x5, x5, wbig, bias4)

    out = out_flat if N4p == N4 else out_flat[:, :, :N4]
    # Free reshape (splits a leading dim) -> final (N, H/2, W/2, 2*C) layout.
    return out.reshape(N, H2, W2, N4)


def _reference(x, weight, bias):
    """Pure-JAX reference mirroring the PyTorch module."""
    x_nchw = jnp.transpose(x, (0, 3, 1, 2))
    y = jax.lax.conv_general_dilated(
        x_nchw, weight, window_strides=(1, 1), padding=((1, 1), (1, 1)),
        dimension_numbers=("NCHW", "OIHW", "NCHW"),
        precision=jax.lax.Precision.HIGHEST)
    y = y + bias[None, :, None, None]
    n, co, h, w = y.shape
    # PixelUnshuffle(2): channel index co*4 + i*2 + j
    z = y.reshape(n, co, h // 2, 2, w // 2, 2)
    z = jnp.transpose(z, (0, 1, 3, 5, 2, 4)).reshape(n, co * 4, h // 2, w // 2)
    return jnp.transpose(z, (0, 2, 3, 1))


if __name__ == "__main__":
    n_feat = 4
    N, H, W = 2, 16, 16

    key = jax.random.PRNGKey(0)
    kx, kw, kb = jax.random.split(key, 3)
    x = jax.random.normal(kx, (N, H, W, n_feat), dtype=jnp.float32)
    weight = 0.1 * jax.random.normal(kw, (n_feat // 2, n_feat, 3, 3),
                                     dtype=jnp.float32)
    bias = 0.1 * jax.random.normal(kb, (n_feat // 2,), dtype=jnp.float32)

    out = jax.block_until_ready(jax.jit(downsample)(x, weight, bias))
    ref = jax.block_until_ready(_reference(x, weight, bias))

    assert out.shape == (N, H // 2, W // 2, 2 * n_feat), out.shape
    max_err = float(jnp.max(jnp.abs(out - ref)))
    assert jnp.allclose(out, ref, atol=5e-3, rtol=5e-3), (
        "mismatch vs reference, max abs diff = %e" % max_err)

    print("KERNEL_OK")
</pallas_src>

<mosaic_0001>
module attributes {stable_mosaic.version = 11 : i64} {
  func.func @kernel(%arg0: i32, %arg1: i32, %arg2: memref<1x4x1x8x8xf32, #tpu.memory_space<vmem>>, %arg3: memref<1x4x1x8x8xf32, #tpu.memory_space<vmem>>, %arg4: memref<1x1x1x8x8xf32, #tpu.memory_space<vmem>>, %arg5: memref<1x1x1x8x8xf32, #tpu.memory_space<vmem>>, %arg6: memref<4x16x128xf32, #tpu.memory_space<vmem>>, %arg7: memref<1x128xf32, #tpu.memory_space<vmem>>, %arg8: memref<1x32x128xf32, #tpu.memory_space<vmem>>, %arg9: memref<40x16xf32, #tpu.memory_space<vmem>>, %arg10: memref<40x16xf32, #tpu.memory_space<vmem>>) attributes {dimension_semantics = [#tpu.dimension_semantics<parallel>, #tpu.dimension_semantics<parallel>], iteration_bounds = array<i64: 2, 2>, scalar_prefetch = 0 : i64, scratch_operands = 2 : i64, tpu.core_type = #tpu.core_type<tc>, window_params = [{transform_indices = @transform_0, window_bounds = array<i64: 1, 4, 1, 8, 8>}, {transform_indices = @transform_1, window_bounds = array<i64: 1, 4, 1, 8, 8>}, {transform_indices = @transform_2, window_bounds = array<i64: 1, 1, 1, 8, 8>}, {transform_indices = @transform_3, window_bounds = array<i64: 1, 1, 1, 8, 8>}, {pipeline_mode = #tpu.pipeline_mode<synchronous>, transform_indices = @transform_4, window_bounds = array<i64: 4, 16, 128>}, {pipeline_mode = #tpu.pipeline_mode<synchronous>, transform_indices = @transform_5, window_bounds = array<i64: 1, 128>}, {transform_indices = @transform_6, window_bounds = array<i64: 1, 32, 128>}]} {
    %c0 = arith.constant 0 : index
    %c0_0 = arith.constant 0 : index
    %c0_1 = arith.constant 0 : index
    %c0_2 = arith.constant 0 : index
    %c0_3 = arith.constant 0 : index
    %0 = vector.load %arg2[%c0, %c0_0, %c0_1, %c0_2, %c0_3] : memref<1x4x1x8x8xf32, #tpu.memory_space<vmem>>, vector<1x4x1x8x8xf32>
    %1 = vector.shape_cast %0 : vector<1x4x1x8x8xf32> to vector<4x8x8xf32>
    %2 = vector.shape_cast %1 : vector<4x8x8xf32> to vector<32x8xf32>
    %3 = vector.extract_strided_slice %2 {offsets = [0, 0], sizes = [32, 4], strides = [1, 1]} : vector<32x8xf32> to vector<32x4xf32>
    %4 = vector.extract_strided_slice %2 {offsets = [0, 4], sizes = [32, 4], strides = [1, 1]} : vector<32x8xf32> to vector<32x4xf32>
    %5 = tpu.iota {dimensions = array<i32: 0>} : vector<32x1xi32>
    %c8_i32 = arith.constant 8 : i32
    %c0_i32 = arith.constant 0 : i32
    %6 = arith.cmpi eq, %c8_i32, %c0_i32 : i32
    %c1_i32 = arith.constant 1 : i32
    %7 = arith.select %6, %c1_i32, %c8_i32 : i32
    %8 = vector.broadcast %7 : i32 to vector<32x1xi32>
    %9 = arith.remsi %5, %8 : vector<32x1xi32>
    %c0_i32_4 = arith.constant 0 : i32
    %10 = vector.broadcast %c0_i32_4 : i32 to vector<32x1xi32>
    %11 = arith.cmpi ne, %9, %10 : vector<32x1xi32>
    %c0_i32_5 = arith.constant 0 : i32
    %12 = vector.broadcast %c0_i32_5 : i32 to vector<32x1xi32>
    %13 = arith.cmpi slt, %9, %12 : vector<32x1xi32>
    %c0_i32_6 = arith.constant 0 : i32
    %14 = arith.cmpi slt, %7, %c0_i32_6 : i32
    %15 = vector.broadcast %14 : i1 to vector<32x1xi1>
    %16 = vector.broadcast %15 : vector<32x1xi1> to vector<32x1xi1>
    %17 = arith.xori %13, %16 : vector<32x1xi1>
    %18 = arith.andi %17, %11 : vector<32x1xi1>
    %19 = vector.broadcast %7 : i32 to vector<32x1xi32>
    %20 = arith.addi %9, %19 : vector<32x1xi32>
    %21 = arith.select %18, %20, %9 : vector<32x1xi1>, vector<32x1xi32>
    %c0_i32_7 = arith.constant 0 : i32
    %22 = vector.broadcast %c0_i32_7 : i32 to vector<32x1xi32>
    %23 = arith.cmpi sgt, %21, %22 : vector<32x1xi32>
    %c1_i32_8 = arith.constant 1 : i32
    %24 = tpu.dynamic_rotate %4 by %c1_i32_8 dim 0 : vector<32x4xf32>, i32 -> vector<32x4xf32>
    %c0_i32_9 = arith.constant 0 : i32
    %25 = arith.sitofp %c0_i32_9 : i32 to f32
    %26 = vector.shape_cast %23 : vector<32x1xi1> to vector<32x1xi1>
    %27 = vector.broadcast %26 : vector<32x1xi1> to vector<32x4xi1>
    %28 = vector.broadcast %25 : f32 to vector<32x4xf32>
    %29 = arith.select %27, %24, %28 : vector<32x4xi1>, vector<32x4xf32>
    %c7_i32 = arith.constant 7 : i32
    %30 = vector.broadcast %c7_i32 : i32 to vector<32x1xi32>
    %31 = arith.cmpi slt, %21, %30 : vector<32x1xi32>
    %c31_i32 = arith.constant 31 : i32
    %32 = tpu.dynamic_rotate %3 by %c31_i32 dim 0 : vector<32x4xf32>, i32 -> vector<32x4xf32>
    %c0_i32_10 = arith.constant 0 : i32
    %33 = arith.sitofp %c0_i32_10 : i32 to f32
    %34 = vector.shape_cast %31 : vector<32x1xi1> to vector<32x1xi1>
    %35 = vector.broadcast %34 : vector<32x1xi1> to vector<32x4xi1>
    %36 = vector.broadcast %33 : f32 to vector<32x4xf32>
    %37 = arith.select %35, %32, %36 : vector<32x4xi1>, vector<32x4xf32>
    %38 = tpu.concatenate %29, %2, %37 in 1 : vector<32x4xf32>, vector<32x8xf32>, vector<32x4xf32> -> vector<32x16xf32>
    %c0_11 = arith.constant 0 : index
    %c0_12 = arith.constant 0 : index
    %39 = vector.load %arg9[%c0_11, %c0_12] : memref<40x16xf32, #tpu.memory_space<vmem>>, vector<32x16xf32>
    tpu.vector_store %arg9[%c0_11, %c0_12], %38 {strides = array<i32>} : memref<40x16xf32, #tpu.memory_space<vmem>>, vector<32x16xf32>,
    %c0_13 = arith.constant 0 : index
    %c0_14 = arith.constant 0 : index
    %c0_15 = arith.constant 0 : index
    %c0_16 = arith.constant 0 : index
    %c0_17 = arith.constant 0 : index
    %40 = vector.load %arg3[%c0_13, %c0_14, %c0_15, %c0_16, %c0_17] : memref<1x4x1x8x8xf32, #tpu.memory_space<vmem>>, vector<1x4x1x8x8xf32>
    %41 = vector.shape_cast %40 : vector<1x4x1x8x8xf32> to vector<4x8x8xf32>
    %42 = vector.shape_cast %41 : vector<4x8x8xf32> to vector<32x8xf32>
    %43 = vector.extract_strided_slice %42 {offsets = [0, 0], sizes = [32, 4], strides = [1, 1]} : vector<32x8xf32> to vector<32x4xf32>
    %44 = vector.extract_strided_slice %42 {offsets = [0, 4], sizes = [32, 4], strides = [1, 1]} : vector<32x8xf32> to vector<32x4xf32>
    %45 = tpu.iota {dimensions = array<i32: 0>} : vector<32x1xi32>
    %c8_i32_18 = arith.constant 8 : i32
    %c0_i32_19 = arith.constant 0 : i32
    %46 = arith.cmpi eq, %c8_i32_18, %c0_i32_19 : i32
    %c1_i32_20 = arith.constant 1 : i32
    %47 = arith.select %46, %c1_i32_20, %c8_i32_18 : i32
    %48 = vector.broadcast %47 : i32 to vector<32x1xi32>
    %49 = arith.remsi %45, %48 : vector<32x1xi32>
    %c0_i32_21 = arith.constant 0 : i32
    %50 = vector.broadcast %c0_i32_21 : i32 to vector<32x1xi32>
    %51 = arith.cmpi ne, %49, %50 : vector<32x1xi32>
    %c0_i32_22 = arith.constant 0 : i32
    %52 = vector.broadcast %c0_i32_22 : i32 to vector<32x1xi32>
    %53 = arith.cmpi slt, %49, %52 : vector<32x1xi32>
    %c0_i32_23 = arith.constant 0 : i32
    %54 = arith.cmpi slt, %47, %c0_i32_23 : i32
    %55 = vector.broadcast %54 : i1 to vector<32x1xi1>
    %56 = vector.broadcast %55 : vector<32x1xi1> to vector<32x1xi1>
    %57 = arith.xori %53, %56 : vector<32x1xi1>
    %58 = arith.andi %57, %51 : vector<32x1xi1>
    %59 = vector.broadcast %47 : i32 to vector<32x1xi32>
    %60 = arith.addi %49, %59 : vector<32x1xi32>
    %61 = arith.select %58, %60, %49 : vector<32x1xi1>, vector<32x1xi32>
    %c0_i32_24 = arith.constant 0 : i32
    %62 = vector.broadcast %c0_i32_24 : i32 to vector<32x1xi32>
    %63 = arith.cmpi sgt, %61, %62 : vector<32x1xi32>
    %c1_i32_25 = arith.constant 1 : i32
    %64 = tpu.dynamic_rotate %44 by %c1_i32_25 dim 0 : vector<32x4xf32>, i32 -> vector<32x4xf32>
    %c0_i32_26 = arith.constant 0 : i32
    %65 = arith.sitofp %c0_i32_26 : i32 to f32
    %66 = vector.shape_cast %63 : vector<32x1xi1> to vector<32x1xi1>
    %67 = vector.broadcast %66 : vector<32x1xi1> to vector<32x4xi1>
    %68 = vector.broadcast %65 : f32 to vector<32x4xf32>
    %69 = arith.select %67, %64, %68 : vector<32x4xi1>, vector<32x4xf32>
    %c7_i32_27 = arith.constant 7 : i32
    %70 = vector.broadcast %c7_i32_27 : i32 to vector<32x1xi32>
    %71 = arith.cmpi slt, %61, %70 : vector<32x1xi32>
    %c31_i32_28 = arith.constant 31 : i32
    %72 = tpu.dynamic_rotate %43 by %c31_i32_28 dim 0 : vector<32x4xf32>, i32 -> vector<32x4xf32>
    %c0_i32_29 = arith.constant 0 : i32
    %73 = arith.sitofp %c0_i32_29 : i32 to f32
    %74 = vector.shape_cast %71 : vector<32x1xi1> to vector<32x1xi1>
    %75 = vector.broadcast %74 : vector<32x1xi1> to vector<32x4xi1>
    %76 = vector.broadcast %73 : f32 to vector<32x4xf32>
    %77 = arith.select %75, %72, %76 : vector<32x4xi1>, vector<32x4xf32>
    %78 = tpu.concatenate %69, %42, %77 in 1 : vector<32x4xf32>, vector<32x8xf32>, vector<32x4xf32> -> vector<32x16xf32>
    %c8 = arith.constant 8 : index
    %c0_30 = arith.constant 0 : index
    %79 = vector.load %arg10[%c8, %c0_30] : memref<40x16xf32, #tpu.memory_space<vmem>>, vector<32x16xf32>
    tpu.vector_store %arg10[%c8, %c0_30], %78 {strides = array<i32>} : memref<40x16xf32, #tpu.memory_space<vmem>>, vector<32x16xf32>,
    %c0_i32_31 = arith.constant 0 : i32
    %80 = arith.cmpi sgt, %arg1, %c0_i32_31 : i32
    %c0_32 = arith.constant 0 : index
    %c0_33 = arith.constant 0 : index
    %c0_34 = arith.constant 0 : index
    %c0_35 = arith.constant 0 : index
    %c0_36 = arith.constant 0 : index
    %81 = vector.load %arg4[%c0_32, %c0_33, %c0_34, %c0_35, %c0_36] : memref<1x1x1x8x8xf32, #tpu.memory_space<vmem>>, vector<1x1x1x8x8xf32>
    %82 = vector.shape_cast %81 : vector<1x1x1x8x8xf32> to vector<8x8xf32>
    %83 = vector.extract_strided_slice %82 {offsets = [0, 0], sizes = [8, 4], strides = [1, 1]} : vector<8x8xf32> to vector<8x4xf32>
    %84 = vector.extract_strided_slice %82 {offsets = [0, 4], sizes = [8, 4], strides = [1, 1]} : vector<8x8xf32> to vector<8x4xf32>
    %85 = tpu.iota {dimensions = array<i32: 0>} : vector<8x1xi32>
    %c8_i32_37 = arith.constant 8 : i32
    %c0_i32_38 = arith.constant 0 : i32
    %86 = arith.cmpi eq, %c8_i32_37, %c0_i32_38 : i32
    %c1_i32_39 = arith.constant 1 : i32
    %87 = arith.select %86, %c1_i32_39, %c8_i32_37 : i32
    %88 = vector.broadcast %87 : i32 to vector<8x1xi32>
    %89 = arith.remsi %85, %88 : vector<8x1xi32>
    %c0_i32_40 = arith.constant 0 : i32
    %90 = vector.broadcast %c0_i32_40 : i32 to vector<8x1xi32>
    %91 = arith.cmpi ne, %89, %90 : vector<8x1xi32>
    %c0_i32_41 = arith.constant 0 : i32
    %92 = vector.broadcast %c0_i32_41 : i32 to vector<8x1xi32>
    %93 = arith.cmpi slt, %89, %92 : vector<8x1xi32>
    %c0_i32_42 = arith.constant 0 : i32
    %94 = arith.cmpi slt, %87, %c0_i32_42 : i32
    %95 = vector.broadcast %94 : i1 to vector<8x1xi1>
    %96 = vector.broadcast %95 : vector<8x1xi1> to vector<8x1xi1>
    %97 = arith.xori %93, %96 : vector<8x1xi1>
    %98 = arith.andi %97, %91 : vector<8x1xi1>
    %99 = vector.broadcast %87 : i32 to vector<8x1xi32>
    %100 = arith.addi %89, %99 : vector<8x1xi32>
    %101 = arith.select %98, %100, %89 : vector<8x1xi1>, vector<8x1xi32>
    %c0_i32_43 = arith.constant 0 : i32
    %102 = vector.broadcast %c0_i32_43 : i32 to vector<8x1xi32>
    %103 = arith.cmpi sgt, %101, %102 : vector<8x1xi32>
    %c1_i32_44 = arith.constant 1 : i32
    %104 = tpu.dynamic_rotate %84 by %c1_i32_44 dim 0 : vector<8x4xf32>, i32 -> vector<8x4xf32>
    %c0_i32_45 = arith.constant 0 : i32
    %105 = arith.sitofp %c0_i32_45 : i32 to f32
    %106 = vector.shape_cast %103 : vector<8x1xi1> to vector<8x1xi1>
    %107 = vector.broadcast %106 : vector<8x1xi1> to vector<8x4xi1>
    %108 = vector.broadcast %105 : f32 to vector<8x4xf32>
    %109 = arith.select %107, %104, %108 : vector<8x4xi1>, vector<8x4xf32>
    %c7_i32_46 = arith.constant 7 : i32
    %110 = vector.broadcast %c7_i32_46 : i32 to vector<8x1xi32>
    %111 = arith.cmpi slt, %101, %110 : vector<8x1xi32>
    %c7_i32_47 = arith.constant 7 : i32
    %112 = tpu.dynamic_rotate %83 by %c7_i32_47 dim 0 : vector<8x4xf32>, i32 -> vector<8x4xf32>
    %c0_i32_48 = arith.constant 0 : i32
    %113 = arith.sitofp %c0_i32_48 : i32 to f32
    %114 = vector.shape_cast %111 : vector<8x1xi1> to vector<8x1xi1>
    %115 = vector.broadcast %114 : vector<8x1xi1> to vector<8x4xi1>
    %116 = vector.broadcast %113 : f32 to vector<8x4xf32>
    %117 = arith.select %115, %112, %116 : vector<8x4xi1>, vector<8x4xf32>
    %118 = tpu.concatenate %109, %82, %117 in 1 : vector<8x4xf32>, vector<8x8xf32>, vector<8x4xf32> -> vector<8x16xf32>
    %c0_i32_49 = arith.constant 0 : i32
    %119 = arith.sitofp %c0_i32_49 : i32 to f32
    %120 = vector.broadcast %119 : f32 to vector<8x16xf32>
    %121 = arith.select %80, %118, %120 : vector<8x16xf32>
    %c0_50 = arith.constant 0 : index
    %c0_51 = arith.constant 0 : index
    %122 = vector.load %arg10[%c0_50, %c0_51] : memref<40x16xf32, #tpu.memory_space<vmem>>, vector<8x16xf32>
    tpu.vector_store %arg10[%c0_50, %c0_51], %121 {strides = array<i32>} : memref<40x16xf32, #tpu.memory_space<vmem>>, vector<8x16xf32>,
    %c1_i32_52 = arith.constant 1 : i32
    %123 = arith.cmpi slt, %arg1, %c1_i32_52 : i32
    %c0_53 = arith.constant 0 : index
    %c0_54 = arith.constant 0 : index
    %c0_55 = arith.constant 0 : index
    %c0_56 = arith.constant 0 : index
    %c0_57 = arith.constant 0 : index
    %124 = vector.load %arg5[%c0_53, %c0_54, %c0_55, %c0_56, %c0_57] : memref<1x1x1x8x8xf32, #tpu.memory_space<vmem>>, vector<1x1x1x8x8xf32>
    %125 = vector.shape_cast %124 : vector<1x1x1x8x8xf32> to vector<8x8xf32>
    %126 = vector.extract_strided_slice %125 {offsets = [0, 0], sizes = [8, 4], strides = [1, 1]} : vector<8x8xf32> to vector<8x4xf32>
    %127 = vector.extract_strided_slice %125 {offsets = [0, 4], sizes = [8, 4], strides = [1, 1]} : vector<8x8xf32> to vector<8x4xf32>
    %128 = tpu.iota {dimensions = array<i32: 0>} : vector<8x1xi32>
    %c8_i32_58 = arith.constant 8 : i32
    %c0_i32_59 = arith.constant 0 : i32
    %129 = arith.cmpi eq, %c8_i32_58, %c0_i32_59 : i32
    %c1_i32_60 = arith.constant 1 : i32
    %130 = arith.select %129, %c1_i32_60, %c8_i32_58 : i32
    %131 = vector.broadcast %130 : i32 to vector<8x1xi32>
    %132 = arith.remsi %128, %131 : vector<8x1xi32>
    %c0_i32_61 = arith.constant 0 : i32
    %133 = vector.broadcast %c0_i32_61 : i32 to vector<8x1xi32>
    %134 = arith.cmpi ne, %132, %133 : vector<8x1xi32>
    %c0_i32_62 = arith.constant 0 : i32
    %135 = vector.broadcast %c0_i32_62 : i32 to vector<8x1xi32>
    %136 = arith.cmpi slt, %132, %135 : vector<8x1xi32>
    %c0_i32_63 = arith.constant 0 : i32
    %137 = arith.cmpi slt, %130, %c0_i32_63 : i32
    %138 = vector.broadcast %137 : i1 to vector<8x1xi1>
    %139 = vector.broadcast %138 : vector<8x1xi1> to vector<8x1xi1>
    %140 = arith.xori %136, %139 : vector<8x1xi1>
    %141 = arith.andi %140, %134 : vector<8x1xi1>
    %142 = vector.broadcast %130 : i32 to vector<8x1xi32>
    %143 = arith.addi %132, %142 : vector<8x1xi32>
    %144 = arith.select %141, %143, %132 : vector<8x1xi1>, vector<8x1xi32>
    %c0_i32_64 = arith.constant 0 : i32
    %145 = vector.broadcast %c0_i32_64 : i32 to vector<8x1xi32>
    %146 = arith.cmpi sgt, %144, %145 : vector<8x1xi32>
    %c1_i32_65 = arith.constant 1 : i32
    %147 = tpu.dynamic_rotate %127 by %c1_i32_65 dim 0 : vector<8x4xf32>, i32 -> vector<8x4xf32>
    %c0_i32_66 = arith.constant 0 : i32
    %148 = arith.sitofp %c0_i32_66 : i32 to f32
    %149 = vector.shape_cast %146 : vector<8x1xi1> to vector<8x1xi1>
    %150 = vector.broadcast %149 : vector<8x1xi1> to vector<8x4xi1>
    %151 = vector.broadcast %148 : f32 to vector<8x4xf32>
    %152 = arith.select %150, %147, %151 : vector<8x4xi1>, vector<8x4xf32>
    %c7_i32_67 = arith.constant 7 : i32
    %153 = vector.broadcast %c7_i32_67 : i32 to vector<8x1xi32>
    %154 = arith.cmpi slt, %144, %153 : vector<8x1xi32>
    %c7_i32_68 = arith.constant 7 : i32
    %155 = tpu.dynamic_rotate %126 by %c7_i32_68 dim 0 : vector<8x4xf32>, i32 -> vector<8x4xf32>
    %c0_i32_69 = arith.constant 0 : i32
    %156 = arith.sitofp %c0_i32_69 : i32 to f32
    %157 = vector.shape_cast %154 : vector<8x1xi1> to vector<8x1xi1>
    %158 = vector.broadcast %157 : vector<8x1xi1> to vector<8x4xi1>
    %159 = vector.broadcast %156 : f32 to vector<8x4xf32>
    %160 = arith.select %158, %155, %159 : vector<8x4xi1>, vector<8x4xf32>
    %161 = tpu.concatenate %152, %125, %160 in 1 : vector<8x4xf32>, vector<8x8xf32>, vector<8x4xf32> -> vector<8x16xf32>
    %c0_i32_70 = arith.constant 0 : i32
    %162 = arith.sitofp %c0_i32_70 : i32 to f32
    %163 = vector.broadcast %162 : f32 to vector<8x16xf32>
    %164 = arith.select %123, %161, %163 : vector<8x16xf32>
    %c32 = arith.constant 32 : index
    %c0_71 = arith.constant 0 : index
    %165 = vector.load %arg9[%c32, %c0_71] : memref<40x16xf32, #tpu.memory_space<vmem>>, vector<8x16xf32>
    tpu.vector_store %arg9[%c32, %c0_71], %164 {strides = array<i32>} : memref<40x16xf32, #tpu.memory_space<vmem>>, vector<8x16xf32>,
    %c0_72 = arith.constant 0 : index
    %c0_73 = arith.constant 0 : index
    %166 = vector.load %arg9[%c0_72, %c0_73] : memref<40x16xf32, #tpu.memory_space<vmem>>, vector<32x16xf32>
    %c1 = arith.constant 1 : index
    %c0_74 = arith.constant 0 : index
    %c0_75 = arith.constant 0 : index
    %167 = vector.load %arg6[%c1, %c0_74, %c0_75] : memref<4x16x128xf32, #tpu.memory_space<vmem>>, vector<1x16x128xf32>
    %168 = vector.shape_cast %167 : vector<1x16x128xf32> to vector<16x128xf32>
    %cst = arith.constant dense<0.000000e+00> : vector<32x128xf32>
    %169 = tpu.matmul %166, %168, %cst {dimension_numbers = #tpu.dot_dimension_numbers<[1], [0], [0], [1], [0, 0, 1, 1], [], []>} : vector<32x16xf32>, vector<16x128xf32>, vector<32x128xf32> -> vector<32x128xf32>
    %c8_76 = arith.constant 8 : index
    %c0_77 = arith.constant 0 : index
    %170 = vector.load %arg10[%c8_76, %c0_77] : memref<40x16xf32, #tpu.memory_space<vmem>>, vector<32x16xf32>
    %c2 = arith.constant 2 : index
    %c0_78 = arith.constant 0 : index
    %c0_79 = arith.constant 0 : index
    %171 = vector.load %arg6[%c2, %c0_78, %c0_79] : memref<4x16x128xf32, #tpu.memory_space<vmem>>, vector<1x16x128xf32>
    %172 = vector.shape_cast %171 : vector<1x16x128xf32> to vector<16x128xf32>
    %cst_80 = arith.constant dense<0.000000e+00> : vector<32x128xf32>
    %173 = tpu.matmul %170, %172, %cst_80 {dimension_numbers = #tpu.dot_dimension_numbers<[1], [0], [0], [1], [0, 0, 1, 1], [], []>} : vector<32x16xf32>, vector<16x128xf32>, vector<32x128xf32> -> vector<32x128xf32>
    %174 = arith.addf %169, %173 : vector<32x128xf32>
    %c0_81 = arith.constant 0 : index
    %c0_82 = arith.constant 0 : index
    %175 = vector.load %arg10[%c0_81, %c0_82] : memref<40x16xf32, #tpu.memory_space<vmem>>, vector<32x16xf32>
    %c0_83 = arith.constant 0 : index
    %c0_84 = arith.constant 0 : index
    %c0_85 = arith.constant 0 : index
    %176 = vector.load %arg6[%c0_83, %c0_84, %c0_85] : memref<4x16x128xf32, #tpu.memory_space<vmem>>, vector<1x16x128xf32>
    %177 = vector.shape_cast %176 : vector<1x16x128xf32> to vector<16x128xf32>
    %cst_86 = arith.constant dense<0.000000e+00> : vector<32x128xf32>
    %178 = tpu.matmul %175, %177, %cst_86 {dimension_numbers = #tpu.dot_dimension_numbers<[1], [0], [0], [1], [0, 0, 1, 1], [], []>} : vector<32x16xf32>, vector<16x128xf32>, vector<32x128xf32> -> vector<32x128xf32>
    %179 = arith.addf %174, %178 : vector<32x128xf32>
    %c8_87 = arith.constant 8 : index
    %c0_88 = arith.constant 0 : index
    %180 = vector.load %arg9[%c8_87, %c0_88] : memref<40x16xf32, #tpu.memory_space<vmem>>, vector<32x16xf32>
    %c3 = arith.constant 3 : index
    %c0_89 = arith.constant 0 : index
    %c0_90 = arith.constant 0 : index
    %181 = vector.load %arg6[%c3, %c0_89, %c0_90] : memref<4x16x128xf32, #tpu.memory_space<vmem>>, vector<1x16x128xf32>
    %182 = vector.shape_cast %181 : vector<1x16x128xf32> to vector<16x128xf32>
    %cst_91 = arith.constant dense<0.000000e+00> : vector<32x128xf32>
    %183 = tpu.matmul %180, %182, %cst_91 {dimension_numbers = #tpu.dot_dimension_numbers<[1], [0], [0], [1], [0, 0, 1, 1], [], []>} : vector<32x16xf32>, vector<16x128xf32>, vector<32x128xf32> -> vector<32x128xf32>
    %184 = arith.addf %179, %183 : vector<32x128xf32>
    %c0_92 = arith.constant 0 : index
    %c0_93 = arith.constant 0 : index
    %185 = vector.load %arg7[%c0_92, %c0_93] : memref<1x128xf32, #tpu.memory_space<vmem>>, vector<1x128xf32>
    %186 = vector.broadcast %185 : vector<1x128xf32> to vector<32x128xf32>
    %187 = arith.addf %184, %186 : vector<32x128xf32>
    %c0_94 = arith.constant 0 : index
    %c0_95 = arith.constant 0 : index
    %c0_96 = arith.constant 0 : index
    %188 = vector.load %arg8[%c0_94, %c0_95, %c0_96] : memref<1x32x128xf32, #tpu.memory_space<vmem>>, vector<1x32x128xf32>
    %189 = vector.shape_cast %188 : vector<1x32x128xf32> to vector<32x128xf32>
    %190 = vector.shape_cast %187 : vector<32x128xf32> to vector<1x32x128xf32>
    tpu.vector_store %arg8[%c0_94, %c0_95, %c0_96], %190 {strides = array<i32>} : memref<1x32x128xf32, #tpu.memory_space<vmem>>, vector<1x32x128xf32>,
    return
  }
  func.func @transform_0(%arg0: i32, %arg1: i32) -> (i32, i32, i32, i32, i32) {
    %c0_i32 = arith.constant 0 : i32
    %c0_i32_0 = arith.constant 0 : i32
    %c0_i32_1 = arith.constant 0 : i32
    %c0_i32_2 = arith.constant 0 : i32
    return %arg0, %arg1, %c0_i32, %c0_i32_0, %c0_i32_1 : i32, i32, i32, i32, i32
  }
  func.func @transform_1(%arg0: i32, %arg1: i32) -> (i32, i32, i32, i32, i32) {
    %c1_i32 = arith.constant 1 : i32
    %c0_i32 = arith.constant 0 : i32
    %c0_i32_0 = arith.constant 0 : i32
    %c0_i32_1 = arith.constant 0 : i32
    return %arg0, %arg1, %c1_i32, %c0_i32, %c0_i32_0 : i32, i32, i32, i32, i32
  }
  func.func @transform_2(%arg0: i32, %arg1: i32) -> (i32, i32, i32, i32, i32) {
    %c4_i32 = arith.constant 4 : i32
    %0 = arith.muli %arg1, %c4_i32 : i32
    %c1_i32 = arith.constant 1 : i32
    %1 = arith.subi %0, %c1_i32 : i32
    %c0_i32 = arith.constant 0 : i32
    %2 = arith.maxsi %1, %c0_i32 : i32
    %c1_i32_0 = arith.constant 1 : i32
    %c0_i32_1 = arith.constant 0 : i32
    %c0_i32_2 = arith.constant 0 : i32
    %c0_i32_3 = arith.constant 0 : i32
    return %arg0, %2, %c1_i32_0, %c0_i32_1, %c0_i32_2 : i32, i32, i32, i32, i32
  }
  func.func @transform_3(%arg0: i32, %arg1: i32) -> (i32, i32, i32, i32, i32) {
    %c1_i32 = arith.constant 1 : i32
    %0 = arith.addi %arg1, %c1_i32 : i32
    %c4_i32 = arith.constant 4 : i32
    %1 = arith.muli %0, %c4_i32 : i32
    %c7_i32 = arith.constant 7 : i32
    %2 = arith.minsi %1, %c7_i32 : i32
    %c0_i32 = arith.constant 0 : i32
    %c0_i32_0 = arith.constant 0 : i32
    %c0_i32_1 = arith.constant 0 : i32
    %c0_i32_2 = arith.constant 0 : i32
    return %arg0, %2, %c0_i32, %c0_i32_0, %c0_i32_1 : i32, i32, i32, i32, i32
  }
  func.func @transform_4(%arg0: i32, %arg1: i32) -> (i32, i32, i32) {
    %c0_i32 = arith.constant 0 : i32
    %c0_i32_0 = arith.constant 0 : i32
    %c0_i32_1 = arith.constant 0 : i32
    %c0_i32_2 = arith.constant 0 : i32
    return %c0_i32, %c0_i32_0, %c0_i32_1 : i32, i32, i32
  }
  func.func @transform_5(%arg0: i32, %arg1: i32) -> (i32, i32) {
    %c0_i32 = arith.constant 0 : i32
    %c0_i32_0 = arith.constant 0 : i32
    %c0_i32_1 = arith.constant 0 : i32
    return %c0_i32, %c0_i32_0 : i32, i32
  }
  func.func @transform_6(%arg0: i32, %arg1: i32) -> (i32, i32, i32) {
    %c0_i32 = arith.constant 0 : i32
    %c0_i32_0 = arith.constant 0 : i32
    return %arg0, %arg1, %c0_i32 : i32, i32, i32
  }
}

</mosaic_0001>

<llo_original>
// kernel: downsample.1
$region0: #{downsample.1}
  #allocation0 [shape = 'u32[]', space=smem, size = 0x4, offset = 0x4, fixed_abs, tag = 'smem constant byte address 0x4 - core index']
  #allocation1 [shape = 'u32[72,128]{1,0:T(1,128)}', space=vmem, size = 0x9000, scoped, tag = 'internal scratch']
  #allocation2 [shape = 'f32[40,16]{1,0:T(8,128)}', space=vmem, size = 0x5000, scoped, tag = 'scratch operand']
  #allocation3 [shape = 'f32[40,16]{1,0:T(8,128)}', space=vmem, size = 0x5000, scoped, tag = 'scratch operand']
  %s0 = inlined_call_operand.vmem [shape: f32[2,8,2,8,8], index: 0, kind: input, shape index: {}, may-alias: {0,1,2,3}]
  %s1 = inlined_call_operand.vmem [shape: f32[2,8,2,8,8], index: 1, kind: input, shape index: {}, may-alias: {0,1,2,3}]
  %s2 = inlined_call_operand.vmem [shape: f32[2,8,2,8,8], index: 2, kind: input, shape index: {}, may-alias: {0,1,2,3}]
  %s3 = inlined_call_operand.vmem [shape: f32[2,8,2,8,8], index: 3, kind: input, shape index: {}, may-alias: {0,1,2,3}]
  %s4 = inlined_call_operand.vmem [shape: f32[4,16,128], index: 4, kind: input, shape index: {}]
  %s5 = inlined_call_operand.vmem [shape: f32[1,128], index: 5, kind: input, shape index: {}]
  %s6 = inlined_call_operand.vmem [shape: f32[2,64,128], index: 6, kind: output, shape index: {}]
  %s7 = sld [smem:[#allocation0]]
  $region133: #{downsample.1} parent=0
    _
  %s9 = ssub.s32 1, %s7
  %s10 = scalar_select 0, %s9, %s7
  $region1: #{downsample.1} parent=0
    #allocation4 [shape = 'u8[32768]{0}', space=vmem, size = 0x8000, scoped, tag = 'input window, operand 0']
    #allocation5 [shape = 'u8[32768]{0}', space=vmem, size = 0x8000, scoped, tag = 'input window, operand 1']
    loop: start=0, step=1, limit=6
    $region2: #{downsample.1} parent=1 // loop_pre_header
      _
    $region3: #{downsample.1} parent=1 // loop_header
      %s12 = sphi 0, %s16
      %p13 = scmp.ge.s32.totalorder %s12, 6
      %s19 = sphi 0, %s31
      %s20 = sphi 0, %s27
      %s21 = sphi 0, %s19
      %s22 = sphi 0, %s20
      %s23 = sphi 0, %s21
      %s24 = sphi 0, %s22
      %s36 = sphi 0, %s38
      %s39 = sphi 0, %s36
      %s40 = sphi 0, %s39
      %s56 = sphi 0, %s40
      %s64 = sphi 0, %s66
      %s67 = sphi 0, %s64
      %s68 = sphi 0, %s67
      %s84 = sphi 0, %s68
      %s100 = sphi 0, %s102
      %s103 = sphi 0, %s100
      %s104 = sphi 0, %s103
      %s120 = sphi 0, %s104
      %s136 = sphi 0, %s138
      %s139 = sphi 0, %s136
      %s140 = sphi 0, %s139
      %s156 = sphi 0, %s140
      %s160 = sphi 0, %s160
      %s162 = sphi 0, %s160
      %s163 = sphi 0, %s162
      %s177 = sphi 0, %s163
      %s181 = sphi 0, %s181
      %s183 = sphi 0, %s181
      %s184 = sphi 0, %s183
      %s198 = sphi 0, %s184
      %s206 = sphi 0, %s208
      %s209 = sphi 0, %s206
      %s210 = sphi 0, %s209
      %s226 = sphi 0, %s210
    $region4: #{downsample.1} parent=1 // loop_header_branch
      %15 = sbr.rel (%p13) target = $region8
    $region5: #{downsample.1} parent=1 // loop_body
      %s17 = ssub.s32 %s12, 1
      %s18 = ssub.s32 %s12, 2
      %s25 = sadd.s32 1, %s20
      %p26 = scmp.ge.s32.totalorder %s25, 2
      %s27 = scalar_select %p26, 0, %s25
      %s28 = sadd.s32 1, %s19
      %s29 = scalar_select %p26, %s28, %s19
      %p30 = scmp.ge.s32.totalorder %s29, 2
      %s31 = scalar_select %p30, 0, %s29
      %s32 = ssub.s32 %s19, %s31
      %s33 = ssub.s32 %s20, %s27
      %s34 = sor.u32 %s32, %s33
      %p35 = scmp.eq.s32.totalorder %s34, 0
      %s37 = sadd.s32 %s36, 1
      %s38 = scalar_select %p35, %s36, %s37
      %p41 = pneg %p35
      %p42 = scmp.eq.s32.totalorder %s12, 3
      %p43 = por %p41, %p42
      %p44 = scmp.ne.s32.totalorder %s36, %s39
      %p45 = scmp.eq.s32.totalorder %s12, 0
      %p46 = por %p44, %p45
      %p47 = scmp.ne.s32.totalorder %s36, %s39
      %p48 = scmp.eq.s32.totalorder %s17, 3
      %p49 = por %p47, %p48
      %p50 = scmp.ne.s32.totalorder %s39, %s40
      %p51 = scmp.eq.s32.totalorder %s17, 0
      %p52 = por %p50, %p51
      %p53 = scmp.ne.s32.totalorder %s39, %s40
      %p54 = scmp.eq.s32.totalorder %s18, 3
      %p55 = por %p53, %p54
      %p57 = scmp.ne.s32.totalorder %s40, %s56
      %p58 = scmp.eq.s32.totalorder %s18, 0
      %p59 = por %p57, %p58
      %s60 = ssub.s32 %s19, %s31
      %s61 = ssub.s32 %s20, %s27
      %s62 = sor.u32 %s60, %s61
      %p63 = scmp.eq.s32.totalorder %s62, 0
      %s65 = sadd.s32 %s64, 1
      %s66 = scalar_select %p63, %s64, %s65
      %p69 = pneg %p63
      %p70 = scmp.eq.s32.totalorder %s12, 3
      %p71 = por %p69, %p70
      %p72 = scmp.ne.s32.totalorder %s64, %s67
      %p73 = scmp.eq.s32.totalorder %s12, 0
      %p74 = por %p72, %p73
      %p75 = scmp.ne.s32.totalorder %s64, %s67
      %p76 = scmp.eq.s32.totalorder %s17, 3
      %p77 = por %p75, %p76
      %p78 = scmp.ne.s32.totalorder %s67, %s68
      %p79 = scmp.eq.s32.totalorder %s17, 0
      %p80 = por %p78, %p79
      %p81 = scmp.ne.s32.totalorder %s67, %s68
      %p82 = scmp.eq.s32.totalorder %s18, 3
      %p83 = por %p81, %p82
      %p85 = scmp.ne.s32.totalorder %s68, %s84
      %p86 = scmp.eq.s32.totalorder %s18, 0
      %p87 = por %p85, %p86
      %s88 = smul.u32 %s20, 4
      %s89 = ssub.s32 %s88, 1
      %p90 = scmp.gt.s32.totalorder %s89, 0
      %s91 = scalar_select %p90, %s89, 0
      %s92 = smul.u32 %s27, 4
      %s93 = ssub.s32 %s92, 1
      %p94 = scmp.gt.s32.totalorder %s93, 0
      %s95 = scalar_select %p94, %s93, 0
      %s96 = ssub.s32 %s19, %s31
      %s97 = ssub.s32 %s91, %s95
      %s98 = sor.u32 %s96, %s97
      %p99 = scmp.eq.s32.totalorder %s98, 0
      %s101 = sadd.s32 %s100, 1
      %s102 = scalar_select %p99, %s100, %s101
      %p105 = pneg %p99
      %p106 = scmp.eq.s32.totalorder %s12, 3
      %p107 = por %p105, %p106
      %p108 = scmp.ne.s32.totalorder %s100, %s103
      %p109 = scmp.eq.s32.totalorder %s12, 0
      %p110 = por %p108, %p109
      %p111 = scmp.ne.s32.totalorder %s100, %s103
      %p112 = scmp.eq.s32.totalorder %s17, 3
      %p113 = por %p111, %p112
      %p114 = scmp.ne.s32.totalorder %s103, %s104
      %p115 = scmp.eq.s32.totalorder %s17, 0
      %p116 = por %p114, %p115
      %p117 = scmp.ne.s32.totalorder %s103, %s104
      %p118 = scmp.eq.s32.totalorder %s18, 3
      %p119 = por %p117, %p118
      %p121 = scmp.ne.s32.totalorder %s104, %s120
      %p122 = scmp.eq.s32.totalorder %s18, 0
      %p123 = por %p121, %p122
      %s124 = sadd.s32 %s20, 1
      %s125 = smul.u32 %s124, 4
      %p126 = scmp.lt.s32.totalorder %s125, 7
      %s127 = scalar_select %p126, %s125, 7
      %s128 = sadd.s32 %s27, 1
      %s129 = smul.u32 %s128, 4
      %p130 = scmp.lt.s32.totalorder %s129, 7
      %s131 = scalar_select %p130, %s129, 7
      %s132 = ssub.s32 %s19, %s31
      %s133 = ssub.s32 %s127, %s131
      %s134 = sor.u32 %s132, %s133
      %p135 = scmp.eq.s32.totalorder %s134, 0
      %s137 = sadd.s32 %s136, 1
      %s138 = scalar_select %p135, %s136, %s137
      %p141 = pneg %p135
      %p142 = scmp.eq.s32.totalorder %s12, 3
      %p143 = por %p141, %p142
      %p144 = scmp.ne.s32.totalorder %s136, %s139
      %p145 = scmp.eq.s32.totalorder %s12, 0
      %p146 = por %p144, %p145
      %p147 = scmp.ne.s32.totalorder %s136, %s139
      %p148 = scmp.eq.s32.totalorder %s17, 3
      %p149 = por %p147, %p148
      %p150 = scmp.ne.s32.totalorder %s139, %s140
      %p151 = scmp.eq.s32.totalorder %s17, 0
      %p152 = por %p150, %p151
      %p153 = scmp.ne.s32.totalorder %s139, %s140
      %p154 = scmp.eq.s32.totalorder %s18, 3
      %p155 = por %p153, %p154
      %p157 = scmp.ne.s32.totalorder %s140, %s156
      %p158 = scmp.eq.s32.totalorder %s18, 0
      %p159 = por %p157, %p158
      %s161 = sadd.s32 %s160, 1
      %p164 = scmp.eq.s32.totalorder %s12, 3
      %p165 = scmp.ne.s32.totalorder %s160, %s162
      %p166 = scmp.eq.s32.totalorder %s12, 0
      %p167 = por %p165, %p166
      %p168 = scmp.ne.s32.totalorder %s160, %s162
      %p169 = scmp.eq.s32.totalorder %s17, 3
      %p170 = por %p168, %p169
      %p171 = scmp.ne.s32.totalorder %s162, %s163
      %p172 = scmp.eq.s32.totalorder %s17, 0
      %p173 = por %p171, %p172
      %p174 = scmp.ne.s32.totalorder %s162, %s163
      %p175 = scmp.eq.s32.totalorder %s18, 3
      %p176 = por %p174, %p175
      %p178 = scmp.ne.s32.totalorder %s163, %s177
      %p179 = scmp.eq.s32.totalorder %s18, 0
      %p180 = por %p178, %p179
      %s182 = sadd.s32 %s181, 1
      %p185 = scmp.eq.s32.totalorder %s12, 3
      %p186 = scmp.ne.s32.totalorder %s181, %s183
      %p187 = scmp.eq.s32.totalorder %s12, 0
      %p188 = por %p186, %p187
      %p189 = scmp.ne.s32.totalorder %s181, %s183
      %p190 = scmp.eq.s32.totalorder %s17, 3
      %p191 = por %p189, %p190
      %p192 = scmp.ne.s32.totalorder %s183, %s184
      %p193 = scmp.eq.s32.totalorder %s17, 0
      %p194 = por %p192, %p193
      %p195 = scmp.ne.s32.totalorder %s183, %s184
      %p196 = scmp.eq.s32.totalorder %s18, 3
      %p197 = por %p195, %p196
      %p199 = scmp.ne.s32.totalorder %s184, %s198
      %p200 = scmp.eq.s32.totalorder %s18, 0
      %p201 = por %p199, %p200
      %s202 = ssub.s32 %s19, %s31
      %s203 = ssub.s32 %s20, %s27
      %s204 = sor.u32 %s202, %s203
      %p205 = scmp.eq.s32.totalorder %s204, 0
      %s207 = sadd.s32 %s206, 1
      %s208 = scalar_select %p205, %s206, %s207
      %p211 = pneg %p205
      %p212 = scmp.eq.s32.totalorder %s12, 3
      %p213 = por %p211, %p212
      %p214 = scmp.ne.s32.totalorder %s206, %s209
      %p215 = scmp.eq.s32.totalorder %s12, 0
      %p216 = por %p214, %p215
      %p217 = scmp.ne.s32.totalorder %s206, %s209
      %p218 = scmp.eq.s32.totalorder %s17, 3
      %p219 = por %p217, %p218
      %p220 = scmp.ne.s32.totalorder %s209, %s210
      %p221 = scmp.eq.s32.totalorder %s17, 0
      %p222 = por %p220, %p221
      %p223 = scmp.ne.s32.totalorder %s209, %s210
      %p224 = scmp.eq.s32.totalorder %s18, 3
      %p225 = por %p223, %p224
      %p227 = scmp.ne.s32.totalorder %s210, %s226
      %p228 = scmp.eq.s32.totalorder %s18, 0
      %p229 = por %p227, %p228
      %p230 = scmp.le.s32.totalorder 1, %s12
      %p231 = scmp.lt.s32.totalorder %s12, 5
      %p232 = pnand %p230, %p231
      %p233 = pneg %p232
      // Predicated region
      $region9: #{downsample.1} parent=5 // pred_check
        _
      $region10: #{downsample.1} parent=5 // pred_check_branch
        %235 = sbr.rel (%p232) target = $region12
      $region11: #{downsample.1} parent=5 // pred_region
        %s236 = ssub.s32 %s12, 1
        // Predicated region
        $region13: #{downsample.1} parent=11 // pred_check
          %p237 = pneg %p173
        $region14: #{downsample.1} parent=11 // pred_check_branch
          %239 = sbr.rel (%p237) target = $region16
        $region15: #{downsample.1} parent=11 // pred_region
          _
        $region16: #{downsample.1} parent=11 // pred_fallthru
          _
        // Predicated region
        $region17: #{downsample.1} parent=11 // pred_check
          %p240 = pneg %p194
        $region18: #{downsample.1} parent=11 // pred_check_branch
          %242 = sbr.rel (%p240) target = $region20
        $region19: #{downsample.1} parent=11 // pred_region
          _
        $region20: #{downsample.1} parent=11 // pred_fallthru
          _
      $region12: #{downsample.1} parent=5 // pred_fallthru
        _
      %p243 = scmp.lt.s32.totalorder %s12, 4
      // Predicated region
      $region21: #{downsample.1} parent=5 // pred_check
        %p244 = pneg %p243
      $region22: #{downsample.1} parent=5 // pred_check_branch
        %246 = sbr.rel (%p244) target = $region24
      $region23: #{downsample.1} parent=5 // pred_region
        // Predicated region
        $region25: #{downsample.1} parent=23 // pred_check
          %p247 = pneg %p46
        $region26: #{downsample.1} parent=23 // pred_check_branch
          %249 = sbr.rel (%p247) target = $region28
        $region27: #{downsample.1} parent=23 // pred_region
          %s250 = sand.u32 %s36, 1
          %s251 = sand.u32 %s36, 1
          %s252 = smul.addr %s251, 32
          %s253 = scalar_lea.vmem [#allocation4], %s252
          %s254 = smul.u32 4, %s20
          %s255 = smul.addr %s254, 2
          %s256 = smul.addr %s19, 16
          %s257 = sadd.s32 %s255, %s256
          %s258 = smul.addr %s257, 8
          %s259 = scalar_lea.vmem %s0, %s258
          // Predicated region
          $region29: #{downsample.1} parent=27 // pred_check
            _
          $region30: #{downsample.1} parent=27 // pred_check_branch
            %261 = sbr.rel (0) target = $region32
          $region31: #{downsample.1} parent=27 // pred_region
            // Predicated region
            $region33: #{downsample.1} parent=31 // pred_check
              _
            $region34: #{downsample.1} parent=31 // pred_check_branch
              %263 = sbr.rel (0) target = $region36
            $region35: #{downsample.1} parent=31 // pred_region
              // Predicated region
              $region48: #{downsample.1} parent=35 // pred_check
                _
              $region49: #{downsample.1} parent=35 // pred_check_branch
                %285 = sbr.rel (0) target = $region51
              $region50: #{downsample.1} parent=35 // pred_region
                loop: start=0, step=1, limit=1
                $region52: #{downsample.1} parent=50 // loop_pre_header
                  _
                $region53: #{downsample.1} parent=50 // loop_header
                  %s287 = sphi 0, %s291
                  %p288 = scmp.ge.s32.totalorder %s287, 1
                  %s292 = sphi %s259, %s259
                  %s293 = sphi %s253, %s253
                $region54: #{downsample.1} parent=50 // loop_header_branch
                  %290 = sbr.rel (%p288) target = $region58
                $region55: #{downsample.1} parent=50 // loop_body
                  %v294 = vld [vmem:[%s292] sm:$0xff]
                  %295 = vst [vmem:[%s293] sm:$0xff] %v294
                  %v296 = vld [vmem:[%s292 + $0x10] sm:$0xff]
                  %297 = vst [vmem:[%s293 + $0x8] sm:$0xff] %v296
                  %v298 = vld [vmem:[%s292 + $0x20] sm:$0xff]
                  %299 = vst [vmem:[%s293 + $0x10] sm:$0xff] %v298
                  %v300 = vld [vmem:[%s292 + $0x30] sm:$0xff]
                  %301 = vst [vmem:[%s293 + $0x18] sm:$0xff] %v300
                $region56: #{downsample.1} parent=50 // loop_footer
                  %s291 = sadd.s32 1, %s287
                $region57: #{downsample.1} parent=50 // loop_footer_branch
                  %286 = sbr.rel target = $region53
                $region58: #{downsample.1} parent=50 // loop_exit
                  _
              $region51: #{downsample.1} parent=35 // pred_fallthru
                _
              // Predicated region
              $region59: #{downsample.1} parent=35 // pred_check
                _
              $region60: #{downsample.1} parent=35 // pred_check_branch
                %303 = sbr.rel target = $region62
              $region61: #{downsample.1} parent=35 // pred_region
                _
              $region62: #{downsample.1} parent=35 // pred_fallthru
                _
            $region36: #{downsample.1} parent=31 // pred_fallthru
              _
            // Predicated region
            $region37: #{downsample.1} parent=31 // pred_check
              _
            $region38: #{downsample.1} parent=31 // pred_check_branch
              %265 = sbr.rel target = $region40
            $region39: #{downsample.1} parent=31 // pred_region
              %s267 = ssub.s32 256, 1
              loop: start=0, step=1, limit=1
              $region41: #{downsample.1} parent=39 // loop_pre_header
                _
              $region42: #{downsample.1} parent=39 // loop_header
                %s269 = sphi 0, %s273
                %p270 = scmp.ge.s32.totalorder %s269, 1
                %s274 = sphi %s259, %s259
                %s275 = sphi %s253, %s253
              $region43: #{downsample.1} parent=39 // loop_header_branch
                %272 = sbr.rel (%p270) target = $region47
              $region44: #{downsample.1} parent=39 // loop_body
                %v276 = vld [vmem:[%s274] sm:%s267]
                %277 = vst [vmem:[%s275] sm:%s267] %v276
                %v278 = vld [vmem:[%s274 + $0x10] sm:%s267]
                %279 = vst [vmem:[%s275 + $0x8] sm:%s267] %v278
                %v280 = vld [vmem:[%s274 + $0x20] sm:%s267]
                %281 = vst [vmem:[%s275 + $0x10] sm:%s267] %v280
                %v282 = vld [vmem:[%s274 + $0x30] sm:%s267]
                %283 = vst [vmem:[%s275 + $0x18] sm:%s267] %v282
              $region45: #{downsample.1} parent=39 // loop_footer
                %s273 = sadd.s32 1, %s269
              $region46: #{downsample.1} parent=39 // loop_footer_branch
                %268 = sbr.rel target = $region42
              $region47: #{downsample.1} parent=39 // loop_exit
                _
            $region40: #{downsample.1} parent=31 // pred_fallthru
              _
          $region32: #{downsample.1} parent=27 // pred_fallthru
            _
          %304 = vnop
        $region28: #{downsample.1} parent=23 // pred_fallthru
          _
        // Predicated region
        $region63: #{downsample.1} parent=23 // pred_check
          %p305 = pneg %p74
        $region64: #{downsample.1} parent=23 // pred_check_branch
          %307 = sbr.rel (%p305) target = $region66
        $region65: #{downsample.1} parent=23 // pred_region
          %s308 = sand.u32 %s64, 1
          %s309 = sand.u32 %s64, 1
          %s310 = smul.addr %s309, 32
          %s311 = scalar_lea.vmem [#allocation5], %s310
          %s312 = smul.u32 4, %s20
          %s313 = smul.addr %s312, 2
          %s314 = sadd.s32 1, %s313
          %s315 = smul.addr %s19, 16
          %s316 = sadd.s32 %s314, %s315
          %s317 = smul.addr %s316, 8
          %s318 = scalar_lea.vmem %s1, %s317
          // Predicated region
          $region67: #{downsample.1} parent=65 // pred_check
            _
          $region68: #{downsample.1} parent=65 // pred_check_branch
            %320 = sbr.rel (0) target = $region70
          $region69: #{downsample.1} parent=65 // pred_region
            // Predicated region
            $region71: #{downsample.1} parent=69 // pred_check
              _
            $region72: #{downsample.1} parent=69 // pred_check_branch
              %322 = sbr.rel (0) target = $region74
            $region73: #{downsample.1} parent=69 // pred_region
              // Predicated region
              $region86: #{downsample.1} parent=73 // pred_check
                _
              $region87: #{downsample.1} parent=73 // pred_check_branch
                %344 = sbr.rel (0) target = $region89
              $region88: #{downsample.1} parent=73 // pred_region
                loop: start=0, step=1, limit=1
                $region90: #{downsample.1} parent=88 // loop_pre_header
                  _
                $region91: #{downsample.1} parent=88 // loop_header
                  %s346 = sphi 0, %s350
                  %p347 = scmp.ge.s32.totalorder %s346, 1
                  %s351 = sphi %s318, %s318
                  %s352 = sphi %s311, %s311
                $region92: #{downsample.1} parent=88 // loop_header_branch
                  %349 = sbr.rel (%p347) target = $region96
                $region93: #{downsample.1} parent=88 // loop_body
                  %v353 = vld [vmem:[%s351] sm:$0xff]
                  %354 = vst [vmem:[%s352] sm:$0xff] %v353
                  %v355 = vld [vmem:[%s351 + $0x10] sm:$0xff]
                  %356 = vst [vmem:[%s352 + $0x8] sm:$0xff] %v355
                  %v357 = vld [vmem:[%s351 + $0x20] sm:$0xff]
                  %358 = vst [vmem:[%s352 + $0x10] sm:$0xff] %v357
                  %v359 = vld [vmem:[%s351 + $0x30] sm:$0xff]
                  %360 = vst [vmem:[%s352 + $0x18] sm:$0xff] %v359
                $region94: #{downsample.1} parent=88 // loop_footer
                  %s350 = sadd.s32 1, %s346
                $region95: #{downsample.1} parent=88 // loop_footer_branch
                  %345 = sbr.rel target = $region91
                $region96: #{downsample.1} parent=88 // loop_exit
                  _
              $region89: #{downsample.1} parent=73 // pred_fallthru
                _
              // Predicated region
              $region97: #{downsample.1} parent=73 // pred_check
                _
              $region98: #{downsample.1} parent=73 // pred_check_branch
                %362 = sbr.rel target = $region100
              $region99: #{downsample.1} parent=73 // pred_region
                _
              $region100: #{downsample.1} parent=73 // pred_fallthru
                _
            $region74: #{downsample.1} parent=69 // pred_fallthru
              _
            // Predicated region
            $region75: #{downsample.1} parent=69 // pred_check
              _
            $region76: #{downsample.1} parent=69 // pred_check_branch
              %324 = sbr.rel target = $region78
            $region77: #{downsample.1} parent=69 // pred_region
              %s326 = ssub.s32 256, 1
              loop: start=0, step=1, limit=1
              $region79: #{downsample.1} parent=77 // loop_pre_header
                _
              $region80: #{downsample.1} parent=77 // loop_header
                %s328 = sphi 0, %s332
                %p329 = scmp.ge.s32.totalorder %s328, 1
                %s333 = sphi %s318, %s318
                %s334 = sphi %s311, %s311
              $region81: #{downsample.1} parent=77 // loop_header_branch
                %331 = sbr.rel (%p329) target = $region85
              $region82: #{downsample.1} parent=77 // loop_body
                %v335 = vld [vmem:[%s333] sm:%s326]
                %336 = vst [vmem:[%s334] sm:%s326] %v335
                %v337 = vld [vmem:[%s333 + $0x10] sm:%s326]
                %338 = vst [vmem:[%s334 + $0x8] sm:%s326] %v337
                %v339 = vld [vmem:[%s333 + $0x20] sm:%s326]
                %340 = vst [vmem:[%s334 + $0x10] sm:%s326] %v339
                %v341 = vld [vmem:[%s333 + $0x30] sm:%s326]
                %342 = vst [vmem:[%s334 + $0x18] sm:%s326] %v341
              $region83: #{downsample.1} parent=77 // loop_footer
                %s332 = sadd.s32 1, %s328
              $region84: #{downsample.1} parent=77 // loop_footer_branch
                %327 = sbr.rel target = $region80
              $region85: #{downsample.1} parent=77 // loop_exit
                _
            $region78: #{downsample.1} parent=69 // pred_fallthru
              _
          $region70: #{downsample.1} parent=65 // pred_fallthru
            _
          %363 = vnop
        $region66: #{downsample.1} parent=23 // pred_fallthru
          _
        // Predicated region
        $region101: #{downsample.1} parent=23 // pred_check
          %p364 = pneg %p110
        $region102: #{downsample.1} parent=23 // pred_check_branch
          %366 = sbr.rel (%p364) target = $region104
        $region103: #{downsample.1} parent=23 // pred_region
          %s367 = smul.u32 %s20, 4
          %s368 = ssub.s32 %s367, 1
          %p369 = scmp.gt.s32.totalorder %s368, 0
          %s370 = scalar_select %p369, %s368, 0
          %p371 = scmp.lt.s32.totalorder %s19, 1
          %s372 = scalar_select %p371, %s19, 1
          %p373 = scmp.lt.s32.totalorder %s370, 7
          %s374 = scalar_select %p373, %s370, 7
          %s375 = smul.addr %s374, 2
          %s376 = sadd.s32 1, %s375
          %s377 = smul.addr %s372, 16
          %s378 = sadd.s32 %s376, %s377
          %s379 = smul.addr %s378, 8
          %s380 = scalar_lea.vmem %s2, %s379
          %s381 = smul.u32 %s20, 4
          %s382 = ssub.s32 %s381, 1
          %p383 = scmp.gt.s32.totalorder %s382, 0
          %s384 = scalar_select %p383, %s382, 0
        $region104: #{downsample.1} parent=23 // pred_fallthru
          _
        // Predicated region
        $region105: #{downsample.1} parent=23 // pred_check
          %p385 = pneg %p146
        $region106: #{downsample.1} parent=23 // pred_check_branch
          %387 = sbr.rel (%p385) target = $region108
        $region107: #{downsample.1} parent=23 // pred_region
          %s388 = sadd.s32 %s20, 1
          %s389 = smul.u32 %s388, 4
          %p390 = scmp.lt.s32.totalorder %s389, 7
          %s391 = scalar_select %p390, %s389, 7
          %p392 = scmp.lt.s32.totalorder %s19, 1
          %s393 = scalar_select %p392, %s19, 1
          %p394 = scmp.lt.s32.totalorder %s391, 7
          %s395 = scalar_select %p394, %s391, 7
          %s396 = smul.addr %s395, 2
          %s397 = smul.addr %s393, 16
          %s398 = sadd.s32 %s396, %s397
          %s399 = smul.addr %s398, 8
          %s400 = scalar_lea.vmem %s3, %s399
          %s401 = sadd.s32 %s20, 1
          %s402 = smul.u32 %s401, 4
          %p403 = scmp.lt.s32.totalorder %s402, 7
          %s404 = scalar_select %p403, %s402, 7
        $region108: #{downsample.1} parent=23 // pred_fallthru
          _
      $region24: #{downsample.1} parent=5 // pred_fallthru
        _
      %p405 = scmp.le.s32.totalorder 1, %s12
      %p406 = scmp.lt.s32.totalorder %s12, 5
      %p407 = pnand %p405, %p406
      %p408 = pneg %p407
      // Predicated region
      $region109: #{downsample.1} parent=5 // pred_check
        _
      $region110: #{downsample.1} parent=5 // pred_check_branch
        %410 = sbr.rel (%p407) target = $region112
      $region111: #{downsample.1} parent=5 // pred_region
        %s411 = ssub.s32 %s12, 1
        %s412 = sand.u32 %s39, 1
        %s413 = sand.u32 %s39, 1
        %s414 = smul.addr %s413, 32
        %s415 = scalar_lea.vmem [#allocation4], %s414
        // Predicated region
        $region113: #{downsample.1} parent=111 // pred_check
          %p416 = pneg %p52
        $region114: #{downsample.1} parent=111 // pred_check_branch
          %418 = sbr.rel (%p416) target = $region116
        $region115: #{downsample.1} parent=111 // pred_region
          _
        $region116: #{downsample.1} parent=111 // pred_fallthru
          _
        %s419 = sand.u32 %s67, 1
        %s420 = sand.u32 %s67, 1
        %s421 = smul.addr %s420, 32
        %s422 = scalar_lea.vmem [#allocation5], %s421
        // Predicated region
        $region117: #{downsample.1} parent=111 // pred_check
          %p423 = pneg %p80
        $region118: #{downsample.1} parent=111 // pred_check_branch
          %425 = sbr.rel (%p423) target = $region120
        $region119: #{downsample.1} parent=111 // pred_region
          _
        $region120: #{downsample.1} parent=111 // pred_fallthru
          _
        %s426 = sand.u32 %s39, 1
        %s427 = sand.u32 %s39, 1
        %s428 = smul.addr %s427, 32
        %s429 = scalar_lea.vmem [#allocation4], %s428
        %p430 = pneg %p52
        %p431 = pneg %p49
        %s432 = sand.u32 %s67, 1
        %s433 = sand.u32 %s67, 1
        %s434 = smul.addr %s433, 32
        %s435 = scalar_lea.vmem [#allocation5], %s434
        %p436 = pneg %p80
        %p437 = pneg %p77
        %s438 = smul.u32 %s22, 4
        %s439 = ssub.s32 %s438, 1
        %p440 = scmp.gt.s32.totalorder %s439, 0
        %s441 = scalar_select %p440, %s439, 0
        %p442 = scmp.lt.s32.totalorder %s21, 1
        %s443 = scalar_select %p442, %s21, 1
        %p444 = scmp.lt.s32.totalorder %s441, 7
        %s445 = scalar_select %p444, %s441, 7
        %s446 = smul.addr %s445, 2
        %s447 = sadd.s32 1, %s446
        %s448 = smul.addr %s443, 16
        %s449 = sadd.s32 %s447, %s448
        %s450 = smul.addr %s449, 8
        %s451 = scalar_lea.vmem %s2, %s450
        %p452 = pneg %p116
        %p453 = pneg %p113
        %s454 = sadd.s32 %s22, 1
        %s455 = smul.u32 %s454, 4
        %p456 = scmp.lt.s32.totalorder %s455, 7
        %s457 = scalar_select %p456, %s455, 7
        %p458 = scmp.lt.s32.totalorder %s21, 1
        %s459 = scalar_select %p458, %s21, 1
        %p460 = scmp.lt.s32.totalorder %s457, 7
        %s461 = scalar_select %p460, %s457, 7
        %s462 = smul.addr %s461, 2
        %s463 = smul.addr %s459, 16
        %s464 = sadd.s32 %s462, %s463
        %s465 = smul.addr %s464, 8
        %s466 = scalar_lea.vmem %s3, %s465
        %p467 = pneg %p152
        %p468 = pneg %p149
        %p469 = pneg %p173
        %p470 = pneg %p170
        %p471 = pneg %p194
        %p472 = pneg %p191
        %p473 = pneg %p222
        %p474 = pneg %p219
        %s475 = smul.u32 4, %s22
        %p476 = scmp.lt.s32.totalorder %s21, 1
        %s477 = scalar_select %p476, %s21, 1
        %p478 = scmp.lt.s32.totalorder %s475, 7
        %s479 = scalar_select %p478, %s475, 7
        %s480 = smul.addr %s477, 8
        %s481 = sadd.s32 %s479, %s480
        %s482 = smul.addr %s481, 8
        %s483 = scalar_lea.vmem %s6, %s482
        %s484 = smul.u32 4, %s22
        %s485 = smul.u32 4, %s22
        %s486 = smul.u32 %s22, 4
        %s487 = ssub.s32 %s486, 1
        %p488 = scmp.gt.s32.totalorder %s487, 0
        %s489 = scalar_select %p488, %s487, 0
        %p490 = scmp.lt.s32.totalorder %s21, 1
        %s491 = scalar_select %p490, %s21, 1
        %p492 = scmp.lt.s32.totalorder %s489, 7
        %s493 = scalar_select %p492, %s489, 7
        %s494 = smul.addr %s493, 2
        %s495 = sadd.s32 1, %s494
        %s496 = smul.addr %s491, 16
        %s497 = sadd.s32 %s495, %s496
        %s498 = smul.addr %s497, 8
        %s499 = scalar_lea.vmem %s2, %s498
        %s500 = smul.u32 %s22, 4
        %s501 = ssub.s32 %s500, 1
        %p502 = scmp.gt.s32.totalorder %s501, 0
        %s503 = scalar_select %p502, %s501, 0
        %s504 = sadd.s32 %s22, 1
        %s505 = smul.u32 %s504, 4
        %p506 = scmp.lt.s32.totalorder %s505, 7
        %s507 = scalar_select %p506, %s505, 7
        %p508 = scmp.lt.s32.totalorder %s21, 1
        %s509 = scalar_select %p508, %s21, 1
        %p510 = scmp.lt.s32.totalorder %s507, 7
        %s511 = scalar_select %p510, %s507, 7
        %s512 = smul.addr %s511, 2
        %s513 = smul.addr %s509, 16
        %s514 = sadd.s32 %s512, %s513
        %s515 = smul.addr %s514, 8
        %s516 = scalar_lea.vmem %s3, %s515
        %s517 = sadd.s32 %s22, 1
        %s518 = smul.u32 %s517, 4
        %p519 = scmp.lt.s32.totalorder %s518, 7
        %s520 = scalar_select %p519, %s518, 7
        %s521 = smul.u32 4, %s22
        %p522 = scmp.lt.s32.totalorder %s21, 1
        %s523 = scalar_select %p522, %s21, 1
        %p524 = scmp.lt.s32.totalorder %s521, 7
        %s525 = scalar_select %p524, %s521, 7
        %s526 = smul.addr %s523, 8
        %s527 = sadd.s32 %s525, %s526
        %s528 = smul.addr %s527, 8
        %s529 = scalar_lea.vmem %s6, %s528
        %s530 = smul.u32 4, %s22
        %v531 = vld [vmem:[%s415] sm:$0xff]
        %v532 = vld [vmem:[%s415 + $0x8] sm:$0xff]
        %v533 = vld [vmem:[%s415 + $0x10] sm:$0xff]
        %v534 = vld [vmem:[%s415 + $0x18] sm:$0xff]
        %v535 = vlaneseq
        %v536 = vshrl.u32 %v535, 7
        %v537 = vadd.s32 %v536, 8
        %v538 = vadd.s32 %v536, 16
        %v539 = vadd.s32 %v536, 24
        %vm540 = vcmp.lt.s32.totalorder %v536, 0
        %v541 = vsub.s32 0, %v536
        %v542 = vsel %vm540, %v541, %v536
        %v543 = vshrl.u32 %v542, 3
        %v544 = vand.u32 %v542, 7
        %v545 = vsub.s32 0, %v544
        %v546 = vsel %vm540, %v545, %v544
        %vm547 = vcmp.lt.s32.totalorder %v537, 0
        %v548 = vsub.s32 0, %v537
        %v549 = vsel %vm547, %v548, %v537
        %v550 = vshrl.u32 %v549, 3
        %v551 = vand.u32 %v549, 7
        %v552 = vsub.s32 0, %v551
        %v553 = vsel %vm547, %v552, %v551
        %vm554 = vcmp.lt.s32.totalorder %v538, 0
        %v555 = vsub.s32 0, %v538
        %v556 = vsel %vm554, %v555, %v538
        %v557 = vshrl.u32 %v556, 3
        %v558 = vand.u32 %v556, 7
        %v559 = vsub.s32 0, %v558
        %v560 = vsel %vm554, %v559, %v558
        %vm561 = vcmp.lt.s32.totalorder %v539, 0
        %v562 = vsub.s32 0, %v539
        %v563 = vsel %vm561, %v562, %v539
        %v564 = vshrl.u32 %v563, 3
        %v565 = vand.u32 %v563, 7
        %v566 = vsub.s32 0, %v565
        %v567 = vsel %vm561, %v566, %v565
        %vm568 = vcmp.ne.s32.totalorder %v546, 0
        %vm569 = vcmp.ne.s32.totalorder %v553, 0
        %vm570 = vcmp.ne.s32.totalorder %v560, 0
        %vm571 = vcmp.ne.s32.totalorder %v567, 0
        %vm572 = vcmp.lt.s32.totalorder %v546, 0
        %vm573 = vcmp.lt.s32.totalorder %v553, 0
        %vm574 = vcmp.lt.s32.totalorder %v560, 0
        %vm575 = vcmp.lt.s32.totalorder %v567, 0
        %vm576 = vmand %vm572, %vm568
        %vm577 = vmand %vm573, %vm569
        %vm578 = vmand %vm574, %vm570
        %vm579 = vmand %vm575, %vm571
        %v580 = vadd.s32 %v546, 8
        %v581 = vadd.s32 %v553, 8
        %v582 = vadd.s32 %v560, 8
        %v583 = vadd.s32 %v567, 8
        %v584 = vsel %vm576, %v580, %v546
        %v585 = vsel %vm577, %v581, %v553
        %v586 = vsel %vm578, %v582, %v560
        %v587 = vsel %vm579, %v583, %v567
        %vm588 = vcmp.gt.s32.totalorder %v584, 0
        %vm589 = vcmp.gt.s32.totalorder %v585, 0
        %vm590 = vcmp.gt.s32.totalorder %v586, 0
        %vm591 = vcmp.gt.s32.totalorder %v587, 0
        %596 = vrot.lane.b32.xlu0 %v531, 124
        %v597 = vpop.permute.xlu0 %596
        %598 = vrot.lane.b32.xlu0 %v532, 124
        %v599 = vpop.permute.xlu0 %598
        %600 = vrot.lane.b32.xlu0 %v533, 124
        %v601 = vpop.permute.xlu0 %600
        %602 = vrot.lane.b32.xlu0 %v534, 124
        %v603 = vpop.permute.xlu0 %602
        %v608 = vrot.slane %v597, 7
        %v609 = vrot.slane %v599, 7
        %v610 = vrot.slane %v601, 7
        %v611 = vrot.slane %v603, 7
        %vm612 = vcmp.lt.s32.totalorder %v536, 1
        %v613 = vsel %vm612, %v610, %v611
        %v614 = vsel %vm612, %v609, %v610
        %v615 = vsel %vm612, %v608, %v609
        %v616 = vsel %vm612, %v611, %v608
        %v617 = vsel %vm588, 1, 0
        %v618 = vsel %vm589, 1, 0
        %v619 = vsel %vm590, 1, 0
        %v620 = vsel %vm591, 1, 0
        %vm621 = vcmp.eq.s32.totalorder %v617, 1
        %vm622 = vcmp.eq.s32.totalorder %v618, 1
        %vm623 = vcmp.eq.s32.totalorder %v619, 1
        %vm624 = vcmp.eq.s32.totalorder %v620, 1
        %v625 = vsel %vm621, %v616, 0.0
        %v626 = vsel %vm622, %v615, 0.0
        %v627 = vsel %vm623, %v614, 0.0
        %v628 = vsel %vm624, %v613, 0.0
        %vm629 = vcmp.lt.s32.totalorder %v584, 7
        %vm630 = vcmp.lt.s32.totalorder %v585, 7
        %vm631 = vcmp.lt.s32.totalorder %v586, 7
        %vm632 = vcmp.lt.s32.totalorder %v587, 7
        %v633 = vrot.slane %v531, 1
        %v634 = vrot.slane %v532, 1
        %v635 = vrot.slane %v533, 1
        %v636 = vrot.slane %v534, 1
        %vm637 = vcmp.lt.s32.totalorder %v536, 7
        %v638 = vsel %vm637, %v635, %v636
        %v639 = vsel %vm637, %v634, %v635
        %v640 = vsel %vm637, %v633, %v634
        %v641 = vsel %vm637, %v636, %v633
        %v642 = vsel %vm629, 1, 0
        %v643 = vsel %vm630, 1, 0
        %v644 = vsel %vm631, 1, 0
        %v645 = vsel %vm632, 1, 0
        %vm646 = vcmp.eq.s32.totalorder %v642, 1
        %vm647 = vcmp.eq.s32.totalorder %v643, 1
        %vm648 = vcmp.eq.s32.totalorder %v644, 1
        %vm649 = vcmp.eq.s32.totalorder %v645, 1
        %v650 = vsel %vm646, %v640, 0.0
        %v651 = vsel %vm647, %v639, 0.0
        %v652 = vsel %vm648, %v638, 0.0
        %v653 = vsel %vm649, %v641, 0.0
        %654 = vrot.lane.b32.xlu0 %v531, 4
        %v655 = vpop.permute.xlu0 %654
        %656 = vrot.lane.b32.xlu0 %v532, 4
        %v657 = vpop.permute.xlu0 %656
        %658 = vrot.lane.b32.xlu0 %v533, 4
        %v659 = vpop.permute.xlu0 %658
        %660 = vrot.lane.b32.xlu0 %v534, 4
        %v661 = vpop.permute.xlu0 %660
        %670 = vrot.lane.b32.xlu0 %v650, 12
        %v671 = vpop.permute.xlu0 %670
        %672 = vrot.lane.b32.xlu0 %v651, 12
        %v673 = vpop.permute.xlu0 %672
        %674 = vrot.lane.b32.xlu0 %v652, 12
        %v675 = vpop.permute.xlu0 %674
        %676 = vrot.lane.b32.xlu0 %v653, 12
        %v677 = vpop.permute.xlu0 %676
        %vm682 = vcmask 31744
        %v683 = vsel %vm682, %v625, %v655
        %v684 = vsel %vm682, %v626, %v657
        %v685 = vsel %vm682, %v627, %v659
        %v686 = vsel %vm682, %v628, %v661
        %vm687 = vcmask 97280
        %v688 = vsel %vm687, %v683, %v671
        %v689 = vsel %vm687, %v684, %v673
        %v690 = vsel %vm687, %v685, %v675
        %v691 = vsel %vm687, %v686, %v677
        %vm692 = vcmask 130048
        %693 = vst.msk [vmem:[#allocation2] sm:$0xff] %vm692, %v688
        %694 = vst.msk [vmem:[#allocation2 + $0x8] sm:$0xff] %vm692, %v689
        %695 = vst.msk [vmem:[#allocation2 + $0x10] sm:$0xff] %vm692, %v690
        %696 = vst.msk [vmem:[#allocation2 + $0x18] sm:$0xff] %vm692, %v691
        %v697 = vld [vmem:[%s422] sm:$0xff]
        %v698 = vld [vmem:[%s422 + $0x8] sm:$0xff]
        %v699 = vld [vmem:[%s422 + $0x10] sm:$0xff]
        %v700 = vld [vmem:[%s422 + $0x18] sm:$0xff]
        %705 = vrot.lane.b32.xlu0 %v697, 124
        %v706 = vpop.permute.xlu0 %705
        %707 = vrot.lane.b32.xlu0 %v698, 124
        %v708 = vpop.permute.xlu0 %707
        %709 = vrot.lane.b32.xlu0 %v699, 124
        %v710 = vpop.permute.xlu0 %709
        %711 = vrot.lane.b32.xlu0 %v700, 124
        %v712 = vpop.permute.xlu0 %711
        %v717 = vrot.slane %v706, 7
        %v718 = vrot.slane %v708, 7
        %v719 = vrot.slane %v710, 7
        %v720 = vrot.slane %v712, 7
        %v721 = vsel %vm612, %v719, %v720
        %v722 = vsel %vm612, %v718, %v719
        %v723 = vsel %vm612, %v717, %v718
        %v724 = vsel %vm612, %v720, %v717
        %v725 = vsel %vm621, %v724, 0.0
        %v726 = vsel %vm622, %v723, 0.0
        %v727 = vsel %vm623, %v722, 0.0
        %v728 = vsel %vm624, %v721, 0.0
        %v729 = vrot.slane %v697, 1
        %v730 = vrot.slane %v698, 1
        %v731 = vrot.slane %v699, 1
        %v732 = vrot.slane %v700, 1
        %v733 = vsel %vm637, %v731, %v732
        %v734 = vsel %vm637, %v730, %v731
        %v735 = vsel %vm637, %v729, %v730
        %v736 = vsel %vm637, %v732, %v729
        %v737 = vsel %vm646, %v735, 0.0
        %v738 = vsel %vm647, %v734, 0.0
        %v739 = vsel %vm648, %v733, 0.0
        %v740 = vsel %vm649, %v736, 0.0
        %741 = vrot.lane.b32.xlu0 %v697, 4
        %v742 = vpop.permute.xlu0 %741
        %743 = vrot.lane.b32.xlu0 %v698, 4
        %v744 = vpop.permute.xlu0 %743
        %745 = vrot.lane.b32.xlu0 %v699, 4
        %v746 = vpop.permute.xlu0 %745
        %747 = vrot.lane.b32.xlu0 %v700, 4
        %v748 = vpop.permute.xlu0 %747
        %757 = vrot.lane.b32.xlu0 %v737, 12
        %v758 = vpop.permute.xlu0 %757
        %759 = vrot.lane.b32.xlu0 %v738, 12
        %v760 = vpop.permute.xlu0 %759
        %761 = vrot.lane.b32.xlu0 %v739, 12
        %v762 = vpop.permute.xlu0 %761
        %763 = vrot.lane.b32.xlu0 %v740, 12
        %v764 = vpop.permute.xlu0 %763
        %v769 = vsel %vm682, %v725, %v742
        %v770 = vsel %vm682, %v726, %v744
        %v771 = vsel %vm682, %v727, %v746
        %v772 = vsel %vm682, %v728, %v748
        %v773 = vsel %vm687, %v769, %v758
        %v774 = vsel %vm687, %v770, %v760
        %v775 = vsel %vm687, %v771, %v762
        %v776 = vsel %vm687, %v772, %v764
        %777 = vst.msk [vmem:[#allocation3 + $0x8] sm:$0xff] %vm692, %v773
        %778 = vst.msk [vmem:[#allocation3 + $0x10] sm:$0xff] %vm692, %v774
        %779 = vst.msk [vmem:[#allocation3 + $0x18] sm:$0xff] %vm692, %v775
        %780 = vst.msk [vmem:[#allocation3 + $0x20] sm:$0xff] %vm692, %v776
        %p781 = scmp.gt.s32.totalorder %s22, 0
        %v782 = vld [vmem:[%s499] sm:$0xff]
        %784 = vrot.lane.b32.xlu0 %v782, 124
        %v785 = vpop.permute.xlu0 %784
        %v787 = vrot.slane %v785, 7
        %v788 = vsel %vm621, %v787, 0.0
        %v789 = vrot.slane %v782, 1
        %v790 = vsel %vm646, %v789, 0.0
        %791 = vrot.lane.b32.xlu0 %v782, 4
        %v792 = vpop.permute.xlu0 %791
        %795 = vrot.lane.b32.xlu0 %v790, 12
        %v796 = vpop.permute.xlu0 %795
        %v798 = vsel %vm682, %v788, %v792
        %v799 = vsel %vm687, %v798, %v796
        %s800 = scalar_select %p781, 1, 0
        %v801 = vstv %s800
        %vm802 = vcmp.eq.s32.totalorder %v801, 1
        %v803 = vsel %vm802, %v799, 0.0
        %804 = vst.msk [vmem:[#allocation3] sm:$0xff] %vm692, %v803
        %p805 = scmp.lt.s32.totalorder %s22, 1
        %v806 = vld [vmem:[%s516] sm:$0xff]
        %808 = vrot.lane.b32.xlu0 %v806, 124
        %v809 = vpop.permute.xlu0 %808
        %v811 = vrot.slane %v809, 7
        %v812 = vsel %vm621, %v811, 0.0
        %v813 = vrot.slane %v806, 1
        %v814 = vsel %vm646, %v813, 0.0
        %815 = vrot.lane.b32.xlu0 %v806, 4
        %v816 = vpop.permute.xlu0 %815
        %819 = vrot.lane.b32.xlu0 %v814, 12
        %v820 = vpop.permute.xlu0 %819
        %v822 = vsel %vm682, %v812, %v816
        %v823 = vsel %vm687, %v822, %v820
        %s824 = scalar_select %p805, 1, 0
        %v825 = vstv %s824
        %vm826 = vcmp.eq.s32.totalorder %v825, 1
        %v827 = vsel %vm826, %v823, 0.0
        %828 = vst.msk [vmem:[#allocation2 + $0x20] sm:$0xff] %vm692, %v827
        %v829 = vld [vmem:[#allocation2] sm:$0xff]
        %v830 = vld [vmem:[#allocation2 + $0x8] sm:$0xff]
        %v831 = vld [vmem:[#allocation2 + $0x10] sm:$0xff]
        %v832 = vld [vmem:[#allocation2 + $0x18] sm:$0xff]
        %s833 = scalar_lea.vmem %s4, 16
        %v834 = vld [vmem:[%s833] sm:$0xff]
        %v835 = vld [vmem:[%s833 + $0x8] sm:$0xff]
        %v836 = vld [vmem:[#allocation3 + $0x8] sm:$0xff]
        %v837 = vld [vmem:[#allocation3 + $0x10] sm:$0xff]
        %v838 = vld [vmem:[#allocation3 + $0x18] sm:$0xff]
        %v839 = vld [vmem:[#allocation3 + $0x20] sm:$0xff]
        %s840 = scalar_lea.vmem %s4, 32
        %v841 = vld [vmem:[%s840] sm:$0xff]
        %v842 = vld [vmem:[%s840 + $0x8] sm:$0xff]
        %v844 = vsel %vm692, %v836, 0
        %v847 = vsel %vm692, %v837, 0
        %v850 = vsel %vm692, %v838, 0
        %v853 = vsel %vm692, %v839, 0
        %855 = vmatpush.msra.mxu0 0.0
        %856 = vmatpush.msra.mxu0 0.0
        %857 = vmatpush.msra.mxu0 0.0
        %858 = vmatpush.msra.mxu0 0.0
        %859 = vmatpush.msra.mxu0 0.0
        %860 = vmatpush.msra.mxu0 0.0
        %861 = vmatpush.msra.mxu0 0.0
        %862 = vmatpush.msra.mxu0 0.0
        %863 = vmatpush.msra.mxu0 0.0
        %864 = vmatpush.msra.mxu0 0.0
        %865 = vmatpush.msra.mxu0 0.0
        %866 = vmatpush.msra.mxu0 0.0
        %867 = vmatpush.msra.mxu0 0.0
        %868 = vmatpush.msra.mxu0 0.0
        %869 = vmatpush.msra.mxu0 %v842
        %870 = vmatpush.msra.mxu0 %v841
        %871 = vmatmul.f32.gmra.mxu0 %v844
        %v872 = vpop.f32.mrf.mxu0
        %v873 = vadd.f32 0.0, %v872
        %874 = vmatmul.f32.gmra.mxu0 %v847
        %v875 = vpop.f32.mrf.mxu0
        %v876 = vadd.f32 0.0, %v875
        %877 = vmatmul.f32.gmra.mxu0 %v850
        %v878 = vpop.f32.mrf.mxu0
        %v879 = vadd.f32 0.0, %v878
        %880 = vmatmul.f32.gmra.mxu0 %v853
        %v881 = vpop.f32.mrf.mxu0
        %v882 = vadd.f32 0.0, %v881
        %883 = vdwg.mxu0
        %v885 = vsel %vm692, %v829, 0
        %v888 = vsel %vm692, %v830, 0
        %v891 = vsel %vm692, %v831, 0
        %v894 = vsel %vm692, %v832, 0
        %896 = vmatpush.msra.mxu0 0.0
        %897 = vmatpush.msra.mxu0 0.0
        %898 = vmatpush.msra.mxu0 0.0
        %899 = vmatpush.msra.mxu0 0.0
        %900 = vmatpush.msra.mxu0 0.0
        %901 = vmatpush.msra.mxu0 0.0
        %902 = vmatpush.msra.mxu0 0.0
        %903 = vmatpush.msra.mxu0 0.0
        %904 = vmatpush.msra.mxu0 0.0
        %905 = vmatpush.msra.mxu0 0.0
        %906 = vmatpush.msra.mxu0 0.0
        %907 = vmatpush.msra.mxu0 0.0
        %908 = vmatpush.msra.mxu0 0.0
        %909 = vmatpush.msra.mxu0 0.0
        %910 = vmatpush.msra.mxu0 %v835
        %911 = vmatpush.msra.mxu0 %v834
        %912 = vmatmul.f32.gmra.mxu0 %v885
        %v913 = vpop.f32.mrf.mxu0
        %v914 = vadd.f32 %v873, %v913
        %915 = vmatmul.f32.gmra.mxu0 %v888
        %v916 = vpop.f32.mrf.mxu0
        %v917 = vadd.f32 %v876, %v916
        %918 = vmatmul.f32.gmra.mxu0 %v891
        %v919 = vpop.f32.mrf.mxu0
        %v920 = vadd.f32 %v879, %v919
        %921 = vmatmul.f32.gmra.mxu0 %v894
        %v922 = vpop.f32.mrf.mxu0
        %v923 = vadd.f32 %v882, %v922
        %924 = vdwg.mxu0
        %v925 = vld [vmem:[#allocation3] sm:$0xff]
        %v926 = vld [vmem:[#allocation3 + $0x8] sm:$0xff]
        %v927 = vld [vmem:[#allocation3 + $0x10] sm:$0xff]
        %v928 = vld [vmem:[#allocation3 + $0x18] sm:$0xff]
        %v929 = vld [vmem:[%s4] sm:$0xff]
        %v930 = vld [vmem:[%s4 + $0x8] sm:$0xff]
        %v932 = vsel %vm692, %v925, 0
        %v935 = vsel %vm692, %v926, 0
        %v938 = vsel %vm692, %v927, 0
        %v941 = vsel %vm692, %v928, 0
        %943 = vmatpush.msra.mxu0 0.0
        %944 = vmatpush.msra.mxu0 0.0
        %945 = vmatpush.msra.mxu0 0.0
        %946 = vmatpush.msra.mxu0 0.0
        %947 = vmatpush.msra.mxu0 0.0
        %948 = vmatpush.msra.mxu0 0.0
        %949 = vmatpush.msra.mxu0 0.0
        %950 = vmatpush.msra.mxu0 0.0
        %951 = vmatpush.msra.mxu0 0.0
        %952 = vmatpush.msra.mxu0 0.0
        %953 = vmatpush.msra.mxu0 0.0
        %954 = vmatpush.msra.mxu0 0.0
        %955 = vmatpush.msra.mxu0 0.0
        %956 = vmatpush.msra.mxu0 0.0
        %957 = vmatpush.msra.mxu0 %v930
        %958 = vmatpush.msra.mxu0 %v929
        %959 = vmatmul.f32.gmra.mxu0 %v932
        %v960 = vpop.f32.mrf.mxu0
        %v961 = vadd.f32 0.0, %v960
        %962 = vmatmul.f32.gmra.mxu0 %v935
        %v963 = vpop.f32.mrf.mxu0
        %v964 = vadd.f32 0.0, %v963
        %965 = vmatmul.f32.gmra.mxu0 %v938
        %v966 = vpop.f32.mrf.mxu0
        %v967 = vadd.f32 0.0, %v966
        %968 = vmatmul.f32.gmra.mxu0 %v941
        %v969 = vpop.f32.mrf.mxu0
        %v970 = vadd.f32 0.0, %v969
        %971 = vdwg.mxu0
        %v972 = vadd.f32 %v914, %v961
        %v973 = vadd.f32 %v917, %v964
        %v974 = vadd.f32 %v920, %v967
        %v975 = vadd.f32 %v923, %v970
        %v976 = vld [vmem:[#allocation2 + $0x8] sm:$0xff]
        %v977 = vld [vmem:[#allocation2 + $0x10] sm:$0xff]
        %v978 = vld [vmem:[#allocation2 + $0x18] sm:$0xff]
        %v979 = vld [vmem:[#allocation2 + $0x20] sm:$0xff]
        %s980 = scalar_lea.vmem %s4, 48
        %v981 = vld [vmem:[%s980] sm:$0xff]
        %v982 = vld [vmem:[%s980 + $0x8] sm:$0xff]
        %v984 = vsel %vm692, %v976, 0
        %v987 = vsel %vm692, %v977, 0
        %v990 = vsel %vm692, %v978, 0
        %v993 = vsel %vm692, %v979, 0
        %995 = vmatpush.msra.mxu0 0.0
        %996 = vmatpush.msra.mxu0 0.0
        %997 = vmatpush.msra.mxu0 0.0
        %998 = vmatpush.msra.mxu0 0.0
        %999 = vmatpush.msra.mxu0 0.0
        %1000 = vmatpush.msra.mxu0 0.0
        %1001 = vmatpush.msra.mxu0 0.0
        %1002 = vmatpush.msra.mxu0 0.0
        %1003 = vmatpush.msra.mxu0 0.0
        %1004 = vmatpush.msra.mxu0 0.0
        %1005 = vmatpush.msra.mxu0 0.0
        %1006 = vmatpush.msra.mxu0 0.0
        %1007 = vmatpush.msra.mxu0 0.0
        %1008 = vmatpush.msra.mxu0 0.0
        %1009 = vmatpush.msra.mxu0 %v982
        %1010 = vmatpush.msra.mxu0 %v981
        %1011 = vmatmul.f32.gmra.mxu0 %v984
        %v1012 = vpop.f32.mrf.mxu0
        %v1013 = vadd.f32 0.0, %v1012
        %1014 = vmatmul.f32.gmra.mxu0 %v987
        %v1015 = vpop.f32.mrf.mxu0
        %v1016 = vadd.f32 0.0, %v1015
        %1017 = vmatmul.f32.gmra.mxu0 %v990
        %v1018 = vpop.f32.mrf.mxu0
        %v1019 = vadd.f32 0.0, %v1018
        %1020 = vmatmul.f32.gmra.mxu0 %v993
        %v1021 = vpop.f32.mrf.mxu0
        %v1022 = vadd.f32 0.0, %v1021
        %1023 = vdwg.mxu0
        %v1024 = vadd.f32 %v972, %v1013
        %v1025 = vadd.f32 %v973, %v1016
        %v1026 = vadd.f32 %v974, %v1019
        %v1027 = vadd.f32 %v975, %v1022
        %v1028 = vld [vmem:[%s5] sm:$0x1]
        %v1030 = vperm.slane %v1028, 0
        %v1032 = vadd.f32 %v1024, %v1030
        %v1033 = vadd.f32 %v1025, %v1030
        %v1034 = vadd.f32 %v1026, %v1030
        %v1035 = vadd.f32 %v1027, %v1030
        %1036 = vst [vmem:[%s529] sm:$0xff] %v1032
        %1037 = vst [vmem:[%s529 + $0x8] sm:$0xff] %v1033
        %1038 = vst [vmem:[%s529 + $0x10] sm:$0xff] %v1034
        %1039 = vst [vmem:[%s529 + $0x18] sm:$0xff] %v1035
        %s1040 = smul.u32 4, %s22
        %p1041 = scmp.lt.s32.totalorder %s21, 1
        %s1042 = scalar_select %p1041, %s21, 1
        %p1043 = scmp.lt.s32.totalorder %s1040, 7
        %s1044 = scalar_select %p1043, %s1040, 7
        %s1045 = smul.addr %s1042, 8
        %s1046 = sadd.s32 %s1044, %s1045
        %s1047 = smul.addr %s1046, 8
        %s1048 = scalar_lea.vmem %s6, %s1047
        // Predicated region
        $region121: #{downsample.1} parent=111 // pred_check
          %p1049 = pneg %p219
        $region122: #{downsample.1} parent=111 // pred_check_branch
          %1051 = sbr.rel (%p1049) target = $region124
        $region123: #{downsample.1} parent=111 // pred_region
          %s1052 = smul.u32 4, %s22
        $region124: #{downsample.1} parent=111 // pred_fallthru
          _
      $region112: #{downsample.1} parent=5 // pred_fallthru
        _
      %p1053 = scmp.le.s32.totalorder 2, %s12
      // Predicated region
      $region125: #{downsample.1} parent=5 // pred_check
        %p1054 = pneg %p1053
      $region126: #{downsample.1} parent=5 // pred_check_branch
        %1056 = sbr.rel (%p1054) target = $region128
      $region127: #{downsample.1} parent=5 // pred_region
        %s1057 = ssub.s32 %s12, 2
        // Predicated region
        $region129: #{downsample.1} parent=127 // pred_check
          %p1058 = pneg %p225
        $region130: #{downsample.1} parent=127 // pred_check_branch
          %1060 = sbr.rel (%p1058) target = $region132
        $region131: #{downsample.1} parent=127 // pred_region
          %s1061 = smul.u32 4, %s24
          %p1062 = scmp.lt.s32.totalorder %s23, 1
          %s1063 = scalar_select %p1062, %s23, 1
          %p1064 = scmp.lt.s32.totalorder %s1061, 7
          %s1065 = scalar_select %p1064, %s1061, 7
          %s1066 = smul.addr %s1063, 8
          %s1067 = sadd.s32 %s1065, %s1066
          %s1068 = smul.addr %s1067, 8
          %s1069 = scalar_lea.vmem %s6, %s1068
        $region132: #{downsample.1} parent=127 // pred_fallthru
          _
      $region128: #{downsample.1} parent=5 // pred_fallthru
        _
    $region6: #{downsample.1} parent=1 // loop_footer
      %s16 = sadd.s32 1, %s12
    $region7: #{downsample.1} parent=1 // loop_footer_branch
      %11 = sbr.rel target = $region3
    $region8: #{downsample.1} parent=1 // loop_exit
      _

</llo_original>
